<compile_context>
chip_gen: v7x
topology: tpu7x:2x2x1
jax: 0.10.0
libtpu: 0.0.40
codegen_flags: <defaults>
</compile_context>

<pallas_src>
import functools

import jax
import jax.numpy as jnp
from jax import lax
from jax.experimental import pallas as pl
from jax.experimental.pallas import tpu as pltpu

EPS = 1e-5


# ---------------------------------------------------------------------------
# In-kernel helpers
# ---------------------------------------------------------------------------

def _pack(x_ref, B):
    """(B, C, L) block -> (C, B*L) slab with samples back-to-back along lanes."""
    if B == 1:
        return x_ref[0]
    return jnp.concatenate([x_ref[b] for b in range(B)], axis=1)


def _conv_packed(hp, w_flat, masks, *, K, mm_dtype):
    """'Same' K-tap 1-D conv of a packed (C, Lp) slab as ONE MXU matmul.

    hp:     (C, Lp) f32, Lp = B*L (B whole samples along the lane axis).
    w_flat: (C_out, K*C_in) mm_dtype with w_flat[o, k*C_in + i] == w[o, i, k].
    masks:  (K, Lp) f32 0/1 validity masks (host-precomputed, L-periodic) that
            zero the lanes where tap k would cross a sample boundary -> this is
            exactly the conv's zero padding, per sample.
    """
    Lp = hp.shape[1]
    pad = K // 2
    parts = []
    for k in range(K):                       # statically unrolled (K == 3)
        d = k - pad
        if d == 0:
            s = hp
        else:
            # rolled[:, p] = hp[:, (p + d) mod Lp]  (XLU lane rotate); the mask
            # zeroes exactly the wrapped lanes.
            s = pltpu.roll(hp, shift=(-d) % Lp, axis=1) * masks[k:k + 1, :]
        parts.append(s.astype(mm_dtype))
    stacked = jnp.concatenate(parts, axis=0)              # (K*C, Lp) mm_dtype
    return jnp.dot(w_flat, stacked, preferred_element_type=jnp.float32)


def _fold_bn(sum_v, sq_v, g, b, inv_count):
    """Fold train-mode BN into per-channel scale/shift from sum / sum-of-sq."""
    mean = sum_v * inv_count
    var = jnp.maximum(sq_v * inv_count - mean * mean, 0.0)  # clamp one-pass var
    scale = g * lax.rsqrt(var + EPS)
    shift = b - mean * scale
    return scale, shift


# ---------------------------------------------------------------------------
# Kernels
# ---------------------------------------------------------------------------

def _conv1_stats_kernel(x_ref, w1_ref, mask_ref, psum_ref, psq_ref,
                        *, K, mm_dtype, B):
    """Pass 1 (tiled): conv1 on one batch block, emit partial BN1 statistics
    only (h1 is never written to HBM; it is recomputed in pass 2)."""
    xp = _pack(x_ref, B)                                           # (C, B*L)
    h1 = _conv_packed(xp, w1_ref[...], mask_ref[...], K=K, mm_dtype=mm_dtype)
    psum_ref[...] = jnp.sum(h1, axis=1, keepdims=True)
    psq_ref[...] = jnp.sum(h1 * h1, axis=1, keepdims=True)


def _bn1_relu_conv2_stats_kernel(x_ref, w1_ref, w2_ref, s1_ref, t1_ref, mask_ref,
                                 h2_ref, psum_ref, psq_ref,
                                 *, K, mm_dtype, B, L):
    """Pass 2 (tiled): recompute conv1, BN1+ReLU, conv2; emit h2 + BN2 stats."""
    xp = _pack(x_ref, B)
    h1 = _conv_packed(xp, w1_ref[...], mask_ref[...], K=K, mm_dtype=mm_dtype)
    a = jnp.maximum(h1 * s1_ref[...] + t1_ref[...], 0.0)          # BN1 + ReLU
    h2 = _conv_packed(a, w2_ref[...], mask_ref[...], K=K, mm_dtype=mm_dtype)
    psum_ref[...] = jnp.sum(h2, axis=1, keepdims=True)
    psq_ref[...] = jnp.sum(h2 * h2, axis=1, keepdims=True)
    for b in range(B):                       # unpack lanes -> (B, C, L) block
        h2_ref[b] = h2[:, b * L:(b + 1) * L].astype(h2_ref.dtype)


def _bn2_residual_relu_kernel(x_ref, h2_ref, s2_ref, t2_ref, o_ref):
    """Pass 3 (tiled): BN2 + residual add + ReLU, purely elementwise."""
    h2 = h2_ref[...].astype(jnp.float32)
    o_ref[...] = jnp.maximum(h2 * s2_ref[...] + t2_ref[...] + x_ref[...], 0.0)


def _fused_kernel(x_ref, w1_ref, w2_ref, g1_ref, b1_ref, g2_ref, b2_ref, mask_ref,
                  o_ref, *, K, mm_dtype, N, L, inv_count):
    """Whole block fused in one kernel: x/h1/h2 stay in VMEM (no HBM round
    trips for intermediates).  Used when the full problem fits in VMEM."""
    xp = _pack(x_ref, N)                                           # (C, N*L)
    h1 = _conv_packed(xp, w1_ref[...], mask_ref[...], K=K, mm_dtype=mm_dtype)
    s1, t1 = _fold_bn(jnp.sum(h1, axis=1, keepdims=True),
                      jnp.sum(h1 * h1, axis=1, keepdims=True),
                      g1_ref[...], b1_ref[...], inv_count)
    a = jnp.maximum(h1 * s1 + t1, 0.0)
    h2 = _conv_packed(a, w2_ref[...], mask_ref[...], K=K, mm_dtype=mm_dtype)
    s2, t2 = _fold_bn(jnp.sum(h2, axis=1, keepdims=True),
                      jnp.sum(h2 * h2, axis=1, keepdims=True),
                      g2_ref[...], b2_ref[...], inv_count)
    out = jnp.maximum(h2 * s2 + t2 + xp, 0.0)
    for b in range(N):
        o_ref[b] = out[:, b * L:(b + 1) * L]


# ---------------------------------------------------------------------------
# Host-side helpers
# ---------------------------------------------------------------------------

def _edge_masks(K, L, B):
    """(K, B*L) f32 0/1 masks: lanes where tap k stays inside its own sample."""
    pad = K // 2
    pos = jnp.arange(B * L, dtype=jnp.int32) % L
    rows = [jnp.logical_and(pos + (k - pad) >= 0,
                            pos + (k - pad) < L).astype(jnp.float32)
            for k in range(K)]
    return jnp.stack(rows, axis=0)


def _pick_block_batch(N, C, L, max_block_bytes=1 << 20):
    """Largest divisor of N whose (B, C, L) f32 block stays <= max_block_bytes
    (keeps double-buffered in/out blocks + matmul temporaries well under the
    scoped VMEM limit even on v7x's 64 MiB)."""
    best = 1
    for b in range(1, N + 1):
        if N % b == 0 and b * C * L * 4 <= max_block_bytes:
            best = b
    return best


def _finalize_bn(psum, psq, g, b, count):
    """Combine per-grid-block partial stats; tiny, runs as plain XLA."""
    return _fold_bn(jnp.sum(psum, axis=0), jnp.sum(psq, axis=0), g, b, 1.0 / count)


def resnet_block(x, w1, w2, g1, b1, g2, b2, *,
                 matmul_dtype=jnp.bfloat16, mode="auto", block_batch=None):
    """x: (N, C, L) f32.  w*: (C, C, K) f32 (PyTorch Conv1d OIK layout).
    g*/b*: (C,) BatchNorm affine parameters.  Returns (N, C, L) f32."""
    N, C, L = x.shape
    K = w1.shape[-1]
    count = float(N * L)
    mm_dtype = jnp.dtype(matmul_dtype)
    # h2 HBM dtype: bf16 on the fast path halves its write+read traffic.
    inter_dtype = jnp.bfloat16 if mm_dtype == jnp.dtype(jnp.bfloat16) else jnp.float32

    # Pre-flatten weights once: each conv is one (C, K*C) @ (K*C, lanes) matmul.
    w1f = jnp.transpose(w1, (0, 2, 1)).reshape(C, K * C).astype(mm_dtype)
    w2f = jnp.transpose(w2, (0, 2, 1)).reshape(C, K * C).astype(mm_dtype)
    g1c = g1.reshape(C, 1).astype(jnp.float32)
    b1c = b1.reshape(C, 1).astype(jnp.float32)
    g2c = g2.reshape(C, 1).astype(jnp.float32)
    b2c = b2.reshape(C, 1).astype(jnp.float32)

    if mode == "auto":
        # Whole problem comfortably VMEM-resident (x/h1/h2/out + temporaries is
        # ~10 slab-equivalents, well under v7x's 64 MiB at this threshold).
        mode = "fused" if N * C * L * 4 <= (2 << 20) else "tiled"
    assert mode in ("fused", "tiled")

    if mode == "fused":
        masks = _edge_masks(K, L, N)
        return pl.pallas_call(
            functools.partial(_fused_kernel, K=K, mm_dtype=mm_dtype,
                              N=N, L=L, inv_count=1.0 / count),
            out_shape=jax.ShapeDtypeStruct((N, C, L), jnp.float32),
        )(x, w1f, w2f, g1c, b1c, g2c, b2c, masks)

    # -------------------------- tiled (general) path -----------------------
    B = block_batch if block_batch is not None else _pick_block_batch(N, C, L)
    assert N % B == 0, "block_batch must divide the batch size"
    G = N // B
    Lp = B * L
    masks = _edge_masks(K, L, B)

    slab = pl.BlockSpec((B, C, L), lambda n: (n, 0, 0))       # B whole samples
    cvec = pl.BlockSpec((C, 1), lambda n: (0, 0))             # per-channel consts
    wspec = pl.BlockSpec((C, K * C), lambda n: (0, 0))
    mspec = pl.BlockSpec((K, Lp), lambda n: (0, 0))
    pstat = pl.BlockSpec((None, C, 1), lambda n: (n, 0, 0))   # per-block stats
    pstat_shape = jax.ShapeDtypeStruct((G, C, 1), jnp.float32)
    parallel = pltpu.CompilerParams(dimension_semantics=("parallel",))

    # Pass 1: conv1 + per-block BN1 partial stats (h1 never hits HBM).
    psum1, psq1 = pl.pallas_call(
        functools.partial(_conv1_stats_kernel, K=K, mm_dtype=mm_dtype, B=B),
        out_shape=(pstat_shape, pstat_shape),
        grid=(G,),
        in_specs=[slab, wspec, mspec],
        out_specs=(pstat, pstat),
        compiler_params=parallel,
    )(x, w1f, masks)
    scale1, shift1 = _finalize_bn(psum1, psq1, g1c, b1c, count)  # tiny XLA op

    # Pass 2: conv1 (recomputed) -> BN1+ReLU -> conv2; emit h2 + BN2 stats.
    h2, psum2, psq2 = pl.pallas_call(
        functools.partial(_bn1_relu_conv2_stats_kernel, K=K, mm_dtype=mm_dtype,
                          B=B, L=L),
        out_shape=(jax.ShapeDtypeStruct((N, C, L), inter_dtype),
                   pstat_shape, pstat_shape),
        grid=(G,),
        in_specs=[slab, wspec, wspec, cvec, cvec, mspec],
        out_specs=(slab, pstat, pstat),
        compiler_params=parallel,
    )(x, w1f, w2f, scale1, shift1, masks)
    scale2, shift2 = _finalize_bn(psum2, psq2, g2c, b2c, count)

    # Pass 3: BN2 + residual + ReLU (pure elementwise, megacore-parallel).
    return pl.pallas_call(
        _bn2_residual_relu_kernel,
        out_shape=jax.ShapeDtypeStruct((N, C, L), jnp.float32),
        grid=(G,),
        in_specs=[slab, slab, cvec, cvec],
        out_specs=slab,
        compiler_params=parallel,
    )(x, h2, scale2, shift2)


# ---------------------------------------------------------------------------
# Pure-JAX reference (mirrors the PyTorch module in train mode)
# ---------------------------------------------------------------------------

def ref_forward(x, w1, w2, g1, b1, g2, b2):
    def conv(h, w):
        return lax.conv_general_dilated(
            h, w, window_strides=(1,), padding=[(w.shape[-1] // 2,) * 2],
            dimension_numbers=("NCH", "OIH", "NCH"))

    def bn(h, g, b):
        mean = h.mean(axis=(0, 2), keepdims=True)
        var = ((h - mean) ** 2).mean(axis=(0, 2), keepdims=True)
        return ((h - mean) / jnp.sqrt(var + EPS) * g.reshape(1, -1, 1)
                + b.reshape(1, -1, 1))

    out = jnp.maximum(bn(conv(x, w1), g1, b1), 0.0)
    out = bn(conv(out, w2), g2, b2) + x
    return jnp.maximum(out, 0.0)


if __name__ == "__main__":
    # Small shapes consistent with the module (in_channels=C, groups=1, k=3).
    N, C, L, K = 8, 32, 128, 3

    key = jax.random.PRNGKey(0)
    kx, kw1, kw2, kg1, kb1, kg2, kb2 = jax.random.split(key, 7)

    x = jax.random.normal(kx, (N, C, L), jnp.float32)
    w1 = 0.05 * jax.random.normal(kw1, (C, C, K), jnp.float32)   # conv1 weight
    w2 = 0.05 * jax.random.normal(kw2, (C, C, K), jnp.float32)   # conv2 weight
    g1 = 1.0 + 0.1 * jax.random.normal(kg1, (C,), jnp.float32)   # bn1 gamma
    b1 = 0.1 * jax.random.normal(kb1, (C,), jnp.float32)         # bn1 beta
    g2 = 1.0 + 0.1 * jax.random.normal(kg2, (C,), jnp.float32)   # bn2 gamma
    b2 = 0.1 * jax.random.normal(kb2, (C,), jnp.float32)         # bn2 beta

    fwd = jax.jit(resnet_block,
                  static_argnames=("matmul_dtype", "mode", "block_batch"))
    ref = jax.block_until_ready(ref_forward(x, w1, w2, g1, b1, g2, b2))

    # Exact path (f32 MXU operands), fused single-kernel (VMEM-resident).
    out_fused = jax.block_until_ready(
        fwd(x, w1, w2, g1, b1, g2, b2, matmul_dtype=jnp.float32, mode="fused"))
    assert out_fused.shape == (N, C, L)
    err = float(jnp.max(jnp.abs(out_fused - ref)))
    assert jnp.allclose(out_fused, ref, atol=1e-3, rtol=1e-3), err

    # Exact path, tiled 3-pass pipeline (4 grid blocks of 2 packed samples).
    out_tiled = jax.block_until_ready(
        fwd(x, w1, w2, g1, b1, g2, b2, matmul_dtype=jnp.float32,
            mode="tiled", block_batch=2))
    err = float(jnp.max(jnp.abs(out_tiled - ref)))
    assert jnp.allclose(out_tiled, ref, atol=1e-3, rtol=1e-3), err

    # Fast path: bf16 MXU operands + bf16 h2 intermediate (BN/residual in f32).
    out_bf_fused = jax.block_until_ready(
        fwd(x, w1, w2, g1, b1, g2, b2, matmul_dtype=jnp.bfloat16))  # auto->fused
    err = float(jnp.max(jnp.abs(out_bf_fused - ref)))
    assert err < 5e-2, err

    out_bf_tiled = jax.block_until_ready(
        fwd(x, w1, w2, g1, b1, g2, b2, matmul_dtype=jnp.bfloat16,
            mode="tiled", block_batch=4))
    err = float(jnp.max(jnp.abs(out_bf_tiled - ref)))
    assert err < 5e-2, err

    print("KERNEL_OK")
</pallas_src>

<mosaic_0001>
module attributes {stable_mosaic.version = 11 : i64} {
  func.func @_fused_kernel(%arg0: memref<8x32x128xf32, #tpu.memory_space<vmem>>, %arg1: memref<32x96xf32, #tpu.memory_space<vmem>>, %arg2: memref<32x96xf32, #tpu.memory_space<vmem>>, %arg3: memref<32x1xf32, #tpu.memory_space<vmem>>, %arg4: memref<32x1xf32, #tpu.memory_space<vmem>>, %arg5: memref<32x1xf32, #tpu.memory_space<vmem>>, %arg6: memref<32x1xf32, #tpu.memory_space<vmem>>, %arg7: memref<3x1024xf32, #tpu.memory_space<vmem>>, %arg8: memref<8x32x128xf32, #tpu.memory_space<vmem>>) attributes {dimension_semantics = [], scalar_prefetch = 0 : i64, scratch_operands = 0 : i64, tpu.core_type = #tpu.core_type<tc>} {
    %c0 = arith.constant 0 : index
    %c0_0 = arith.constant 0 : index
    %c0_1 = arith.constant 0 : index
    %0 = vector.load %arg0[%c0, %c0_0, %c0_1] : memref<8x32x128xf32, #tpu.memory_space<vmem>>, vector<1x32x128xf32>
    %1 = vector.shape_cast %0 : vector<1x32x128xf32> to vector<32x128xf32>
    %c1 = arith.constant 1 : index
    %c0_2 = arith.constant 0 : index
    %c0_3 = arith.constant 0 : index
    %2 = vector.load %arg0[%c1, %c0_2, %c0_3] : memref<8x32x128xf32, #tpu.memory_space<vmem>>, vector<1x32x128xf32>
    %3 = vector.shape_cast %2 : vector<1x32x128xf32> to vector<32x128xf32>
    %c2 = arith.constant 2 : index
    %c0_4 = arith.constant 0 : index
    %c0_5 = arith.constant 0 : index
    %4 = vector.load %arg0[%c2, %c0_4, %c0_5] : memref<8x32x128xf32, #tpu.memory_space<vmem>>, vector<1x32x128xf32>
    %5 = vector.shape_cast %4 : vector<1x32x128xf32> to vector<32x128xf32>
    %c3 = arith.constant 3 : index
    %c0_6 = arith.constant 0 : index
    %c0_7 = arith.constant 0 : index
    %6 = vector.load %arg0[%c3, %c0_6, %c0_7] : memref<8x32x128xf32, #tpu.memory_space<vmem>>, vector<1x32x128xf32>
    %7 = vector.shape_cast %6 : vector<1x32x128xf32> to vector<32x128xf32>
    %c4 = arith.constant 4 : index
    %c0_8 = arith.constant 0 : index
    %c0_9 = arith.constant 0 : index
    %8 = vector.load %arg0[%c4, %c0_8, %c0_9] : memref<8x32x128xf32, #tpu.memory_space<vmem>>, vector<1x32x128xf32>
    %9 = vector.shape_cast %8 : vector<1x32x128xf32> to vector<32x128xf32>
    %c5 = arith.constant 5 : index
    %c0_10 = arith.constant 0 : index
    %c0_11 = arith.constant 0 : index
    %10 = vector.load %arg0[%c5, %c0_10, %c0_11] : memref<8x32x128xf32, #tpu.memory_space<vmem>>, vector<1x32x128xf32>
    %11 = vector.shape_cast %10 : vector<1x32x128xf32> to vector<32x128xf32>
    %c6 = arith.constant 6 : index
    %c0_12 = arith.constant 0 : index
    %c0_13 = arith.constant 0 : index
    %12 = vector.load %arg0[%c6, %c0_12, %c0_13] : memref<8x32x128xf32, #tpu.memory_space<vmem>>, vector<1x32x128xf32>
    %13 = vector.shape_cast %12 : vector<1x32x128xf32> to vector<32x128xf32>
    %c7 = arith.constant 7 : index
    %c0_14 = arith.constant 0 : index
    %c0_15 = arith.constant 0 : index
    %14 = vector.load %arg0[%c7, %c0_14, %c0_15] : memref<8x32x128xf32, #tpu.memory_space<vmem>>, vector<1x32x128xf32>
    %15 = vector.shape_cast %14 : vector<1x32x128xf32> to vector<32x128xf32>
    %16 = tpu.concatenate %1, %3, %5, %7, %9, %11, %13, %15 in 1 : vector<32x128xf32>, vector<32x128xf32>, vector<32x128xf32>, vector<32x128xf32>, vector<32x128xf32>, vector<32x128xf32>, vector<32x128xf32>, vector<32x128xf32> -> vector<32x1024xf32>
    %c0_16 = arith.constant 0 : index
    %c0_17 = arith.constant 0 : index
    %17 = vector.load %arg1[%c0_16, %c0_17] : memref<32x96xf32, #tpu.memory_space<vmem>>, vector<32x96xf32>
    %c0_18 = arith.constant 0 : index
    %c0_19 = arith.constant 0 : index
    %18 = vector.load %arg7[%c0_18, %c0_19] : memref<3x1024xf32, #tpu.memory_space<vmem>>, vector<3x1024xf32>
    %c1_i32 = arith.constant 1 : i32
    %19 = tpu.dynamic_rotate %16 by %c1_i32 dim 1 : vector<32x1024xf32>, i32 -> vector<32x1024xf32>
    %20 = vector.extract_strided_slice %18 {offsets = [0, 0], sizes = [1, 1024], strides = [1, 1]} : vector<3x1024xf32> to vector<1x1024xf32>
    %21 = vector.broadcast %20 : vector<1x1024xf32> to vector<32x1024xf32>
    %22 = arith.mulf %19, %21 : vector<32x1024xf32>
    %c1023_i32 = arith.constant 1023 : i32
    %23 = tpu.dynamic_rotate %16 by %c1023_i32 dim 1 : vector<32x1024xf32>, i32 -> vector<32x1024xf32>
    %24 = vector.extract_strided_slice %18 {offsets = [2, 0], sizes = [1, 1024], strides = [1, 1]} : vector<3x1024xf32> to vector<1x1024xf32>
    %25 = vector.broadcast %24 : vector<1x1024xf32> to vector<32x1024xf32>
    %26 = arith.mulf %23, %25 : vector<32x1024xf32>
    %27 = tpu.concatenate %22, %16, %26 in 0 : vector<32x1024xf32>, vector<32x1024xf32>, vector<32x1024xf32> -> vector<96x1024xf32>
    %cst = arith.constant dense<0.000000e+00> : vector<32x1024xf32>
    %28 = tpu.matmul %17, %27, %cst {dimension_numbers = #tpu.dot_dimension_numbers<[1], [0], [0], [1], [0, 0, 1, 1], [], []>} : vector<32x96xf32>, vector<96x1024xf32>, vector<32x1024xf32> -> vector<32x1024xf32>
    %cst_20 = arith.constant dense<0.000000e+00> : vector<32xf32>
    %29 = vector.multi_reduction <add>, %28, %cst_20 [1] : vector<32x1024xf32> to vector<32xf32>
    %30 = vector.shape_cast %29 : vector<32xf32> to vector<32x1xf32>
    %31 = arith.mulf %28, %28 : vector<32x1024xf32>
    %cst_21 = arith.constant dense<0.000000e+00> : vector<32xf32>
    %32 = vector.multi_reduction <add>, %31, %cst_21 [1] : vector<32x1024xf32> to vector<32xf32>
    %33 = vector.shape_cast %32 : vector<32xf32> to vector<32x1xf32>
    %c0_22 = arith.constant 0 : index
    %c0_23 = arith.constant 0 : index
    %34 = vector.load %arg3[%c0_22, %c0_23] : memref<32x1xf32, #tpu.memory_space<vmem>>, vector<32x1xf32>
    %c0_24 = arith.constant 0 : index
    %c0_25 = arith.constant 0 : index
    %35 = vector.load %arg4[%c0_24, %c0_25] : memref<32x1xf32, #tpu.memory_space<vmem>>, vector<32x1xf32>
    %cst_26 = arith.constant 9.765625E-4 : f32
    %36 = vector.broadcast %cst_26 : f32 to vector<32x1xf32>
    %37 = arith.mulf %30, %36 : vector<32x1xf32>
    %cst_27 = arith.constant 9.765625E-4 : f32
    %38 = vector.broadcast %cst_27 : f32 to vector<32x1xf32>
    %39 = arith.mulf %33, %38 : vector<32x1xf32>
    %40 = arith.mulf %37, %37 : vector<32x1xf32>
    %41 = arith.subf %39, %40 : vector<32x1xf32>
    %cst_28 = arith.constant 0.000000e+00 : f32
    %42 = vector.broadcast %cst_28 : f32 to vector<32x1xf32>
    %43 = arith.maximumf %41, %42 : vector<32x1xf32>
    %cst_29 = arith.constant 9.99999974E-6 : f32
    %44 = vector.broadcast %cst_29 : f32 to vector<32x1xf32>
    %45 = arith.addf %43, %44 : vector<32x1xf32>
    %46 = math.rsqrt %45 : vector<32x1xf32>
    %47 = arith.mulf %34, %46 : vector<32x1xf32>
    %48 = arith.mulf %37, %47 : vector<32x1xf32>
    %49 = arith.subf %35, %48 : vector<32x1xf32>
    %50 = vector.broadcast %47 : vector<32x1xf32> to vector<32x1024xf32>
    %51 = arith.mulf %28, %50 : vector<32x1024xf32>
    %52 = vector.broadcast %49 : vector<32x1xf32> to vector<32x1024xf32>
    %53 = arith.addf %51, %52 : vector<32x1024xf32>
    %cst_30 = arith.constant 0.000000e+00 : f32
    %54 = vector.broadcast %cst_30 : f32 to vector<32x1024xf32>
    %55 = arith.maximumf %53, %54 : vector<32x1024xf32>
    %c0_31 = arith.constant 0 : index
    %c0_32 = arith.constant 0 : index
    %56 = vector.load %arg2[%c0_31, %c0_32] : memref<32x96xf32, #tpu.memory_space<vmem>>, vector<32x96xf32>
    %c0_33 = arith.constant 0 : index
    %c0_34 = arith.constant 0 : index
    %57 = vector.load %arg7[%c0_33, %c0_34] : memref<3x1024xf32, #tpu.memory_space<vmem>>, vector<3x1024xf32>
    %c1_i32_35 = arith.constant 1 : i32
    %58 = tpu.dynamic_rotate %55 by %c1_i32_35 dim 1 : vector<32x1024xf32>, i32 -> vector<32x1024xf32>
    %59 = vector.extract_strided_slice %57 {offsets = [0, 0], sizes = [1, 1024], strides = [1, 1]} : vector<3x1024xf32> to vector<1x1024xf32>
    %60 = vector.broadcast %59 : vector<1x1024xf32> to vector<32x1024xf32>
    %61 = arith.mulf %58, %60 : vector<32x1024xf32>
    %c1023_i32_36 = arith.constant 1023 : i32
    %62 = tpu.dynamic_rotate %55 by %c1023_i32_36 dim 1 : vector<32x1024xf32>, i32 -> vector<32x1024xf32>
    %63 = vector.extract_strided_slice %57 {offsets = [2, 0], sizes = [1, 1024], strides = [1, 1]} : vector<3x1024xf32> to vector<1x1024xf32>
    %64 = vector.broadcast %63 : vector<1x1024xf32> to vector<32x1024xf32>
    %65 = arith.mulf %62, %64 : vector<32x1024xf32>
    %66 = tpu.concatenate %61, %55, %65 in 0 : vector<32x1024xf32>, vector<32x1024xf32>, vector<32x1024xf32> -> vector<96x1024xf32>
    %cst_37 = arith.constant dense<0.000000e+00> : vector<32x1024xf32>
    %67 = tpu.matmul %56, %66, %cst_37 {dimension_numbers = #tpu.dot_dimension_numbers<[1], [0], [0], [1], [0, 0, 1, 1], [], []>} : vector<32x96xf32>, vector<96x1024xf32>, vector<32x1024xf32> -> vector<32x1024xf32>
    %cst_38 = arith.constant dense<0.000000e+00> : vector<32xf32>
    %68 = vector.multi_reduction <add>, %67, %cst_38 [1] : vector<32x1024xf32> to vector<32xf32>
    %69 = vector.shape_cast %68 : vector<32xf32> to vector<32x1xf32>
    %70 = arith.mulf %67, %67 : vector<32x1024xf32>
    %cst_39 = arith.constant dense<0.000000e+00> : vector<32xf32>
    %71 = vector.multi_reduction <add>, %70, %cst_39 [1] : vector<32x1024xf32> to vector<32xf32>
    %72 = vector.shape_cast %71 : vector<32xf32> to vector<32x1xf32>
    %c0_40 = arith.constant 0 : index
    %c0_41 = arith.constant 0 : index
    %73 = vector.load %arg5[%c0_40, %c0_41] : memref<32x1xf32, #tpu.memory_space<vmem>>, vector<32x1xf32>
    %c0_42 = arith.constant 0 : index
    %c0_43 = arith.constant 0 : index
    %74 = vector.load %arg6[%c0_42, %c0_43] : memref<32x1xf32, #tpu.memory_space<vmem>>, vector<32x1xf32>
    %cst_44 = arith.constant 9.765625E-4 : f32
    %75 = vector.broadcast %cst_44 : f32 to vector<32x1xf32>
    %76 = arith.mulf %69, %75 : vector<32x1xf32>
    %cst_45 = arith.constant 9.765625E-4 : f32
    %77 = vector.broadcast %cst_45 : f32 to vector<32x1xf32>
    %78 = arith.mulf %72, %77 : vector<32x1xf32>
    %79 = arith.mulf %76, %76 : vector<32x1xf32>
    %80 = arith.subf %78, %79 : vector<32x1xf32>
    %cst_46 = arith.constant 0.000000e+00 : f32
    %81 = vector.broadcast %cst_46 : f32 to vector<32x1xf32>
    %82 = arith.maximumf %80, %81 : vector<32x1xf32>
    %cst_47 = arith.constant 9.99999974E-6 : f32
    %83 = vector.broadcast %cst_47 : f32 to vector<32x1xf32>
    %84 = arith.addf %82, %83 : vector<32x1xf32>
    %85 = math.rsqrt %84 : vector<32x1xf32>
    %86 = arith.mulf %73, %85 : vector<32x1xf32>
    %87 = arith.mulf %76, %86 : vector<32x1xf32>
    %88 = arith.subf %74, %87 : vector<32x1xf32>
    %89 = vector.broadcast %86 : vector<32x1xf32> to vector<32x1024xf32>
    %90 = arith.mulf %67, %89 : vector<32x1024xf32>
    %91 = vector.broadcast %88 : vector<32x1xf32> to vector<32x1024xf32>
    %92 = arith.addf %90, %91 : vector<32x1024xf32>
    %93 = arith.addf %92, %16 : vector<32x1024xf32>
    %cst_48 = arith.constant 0.000000e+00 : f32
    %94 = vector.broadcast %cst_48 : f32 to vector<32x1024xf32>
    %95 = arith.maximumf %93, %94 : vector<32x1024xf32>
    %96 = vector.extract_strided_slice %95 {offsets = [0, 0], sizes = [32, 128], strides = [1, 1]} : vector<32x1024xf32> to vector<32x128xf32>
    %c0_49 = arith.constant 0 : index
    %c0_50 = arith.constant 0 : index
    %c0_51 = arith.constant 0 : index
    %97 = vector.load %arg8[%c0_49, %c0_50, %c0_51] : memref<8x32x128xf32, #tpu.memory_space<vmem>>, vector<1x32x128xf32>
    %98 = vector.shape_cast %97 : vector<1x32x128xf32> to vector<32x128xf32>
    %99 = vector.shape_cast %96 : vector<32x128xf32> to vector<1x32x128xf32>
    tpu.vector_store %arg8[%c0_49, %c0_50, %c0_51], %99 {strides = array<i32>} : memref<8x32x128xf32, #tpu.memory_space<vmem>>, vector<1x32x128xf32>,
    %100 = vector.extract_strided_slice %95 {offsets = [0, 128], sizes = [32, 128], strides = [1, 1]} : vector<32x1024xf32> to vector<32x128xf32>
    %c1_52 = arith.constant 1 : index
    %c0_53 = arith.constant 0 : index
    %c0_54 = arith.constant 0 : index
    %101 = vector.load %arg8[%c1_52, %c0_53, %c0_54] : memref<8x32x128xf32, #tpu.memory_space<vmem>>, vector<1x32x128xf32>
    %102 = vector.shape_cast %101 : vector<1x32x128xf32> to vector<32x128xf32>
    %103 = vector.shape_cast %100 : vector<32x128xf32> to vector<1x32x128xf32>
    tpu.vector_store %arg8[%c1_52, %c0_53, %c0_54], %103 {strides = array<i32>} : memref<8x32x128xf32, #tpu.memory_space<vmem>>, vector<1x32x128xf32>,
    %104 = vector.extract_strided_slice %95 {offsets = [0, 256], sizes = [32, 128], strides = [1, 1]} : vector<32x1024xf32> to vector<32x128xf32>
    %c2_55 = arith.constant 2 : index
    %c0_56 = arith.constant 0 : index
    %c0_57 = arith.constant 0 : index
    %105 = vector.load %arg8[%c2_55, %c0_56, %c0_57] : memref<8x32x128xf32, #tpu.memory_space<vmem>>, vector<1x32x128xf32>
    %106 = vector.shape_cast %105 : vector<1x32x128xf32> to vector<32x128xf32>
    %107 = vector.shape_cast %104 : vector<32x128xf32> to vector<1x32x128xf32>
    tpu.vector_store %arg8[%c2_55, %c0_56, %c0_57], %107 {strides = array<i32>} : memref<8x32x128xf32, #tpu.memory_space<vmem>>, vector<1x32x128xf32>,
    %108 = vector.extract_strided_slice %95 {offsets = [0, 384], sizes = [32, 128], strides = [1, 1]} : vector<32x1024xf32> to vector<32x128xf32>
    %c3_58 = arith.constant 3 : index
    %c0_59 = arith.constant 0 : index
    %c0_60 = arith.constant 0 : index
    %109 = vector.load %arg8[%c3_58, %c0_59, %c0_60] : memref<8x32x128xf32, #tpu.memory_space<vmem>>, vector<1x32x128xf32>
    %110 = vector.shape_cast %109 : vector<1x32x128xf32> to vector<32x128xf32>
    %111 = vector.shape_cast %108 : vector<32x128xf32> to vector<1x32x128xf32>
    tpu.vector_store %arg8[%c3_58, %c0_59, %c0_60], %111 {strides = array<i32>} : memref<8x32x128xf32, #tpu.memory_space<vmem>>, vector<1x32x128xf32>,
    %112 = vector.extract_strided_slice %95 {offsets = [0, 512], sizes = [32, 128], strides = [1, 1]} : vector<32x1024xf32> to vector<32x128xf32>
    %c4_61 = arith.constant 4 : index
    %c0_62 = arith.constant 0 : index
    %c0_63 = arith.constant 0 : index
    %113 = vector.load %arg8[%c4_61, %c0_62, %c0_63] : memref<8x32x128xf32, #tpu.memory_space<vmem>>, vector<1x32x128xf32>
    %114 = vector.shape_cast %113 : vector<1x32x128xf32> to vector<32x128xf32>
    %115 = vector.shape_cast %112 : vector<32x128xf32> to vector<1x32x128xf32>
    tpu.vector_store %arg8[%c4_61, %c0_62, %c0_63], %115 {strides = array<i32>} : memref<8x32x128xf32, #tpu.memory_space<vmem>>, vector<1x32x128xf32>,
    %116 = vector.extract_strided_slice %95 {offsets = [0, 640], sizes = [32, 128], strides = [1, 1]} : vector<32x1024xf32> to vector<32x128xf32>
    %c5_64 = arith.constant 5 : index
    %c0_65 = arith.constant 0 : index
    %c0_66 = arith.constant 0 : index
    %117 = vector.load %arg8[%c5_64, %c0_65, %c0_66] : memref<8x32x128xf32, #tpu.memory_space<vmem>>, vector<1x32x128xf32>
    %118 = vector.shape_cast %117 : vector<1x32x128xf32> to vector<32x128xf32>
    %119 = vector.shape_cast %116 : vector<32x128xf32> to vector<1x32x128xf32>
    tpu.vector_store %arg8[%c5_64, %c0_65, %c0_66], %119 {strides = array<i32>} : memref<8x32x128xf32, #tpu.memory_space<vmem>>, vector<1x32x128xf32>,
    %120 = vector.extract_strided_slice %95 {offsets = [0, 768], sizes = [32, 128], strides = [1, 1]} : vector<32x1024xf32> to vector<32x128xf32>
    %c6_67 = arith.constant 6 : index
    %c0_68 = arith.constant 0 : index
    %c0_69 = arith.constant 0 : index
    %121 = vector.load %arg8[%c6_67, %c0_68, %c0_69] : memref<8x32x128xf32, #tpu.memory_space<vmem>>, vector<1x32x128xf32>
    %122 = vector.shape_cast %121 : vector<1x32x128xf32> to vector<32x128xf32>
    %123 = vector.shape_cast %120 : vector<32x128xf32> to vector<1x32x128xf32>
    tpu.vector_store %arg8[%c6_67, %c0_68, %c0_69], %123 {strides = array<i32>} : memref<8x32x128xf32, #tpu.memory_space<vmem>>, vector<1x32x128xf32>,
    %124 = vector.extract_strided_slice %95 {offsets = [0, 896], sizes = [32, 128], strides = [1, 1]} : vector<32x1024xf32> to vector<32x128xf32>
    %c7_70 = arith.constant 7 : index
    %c0_71 = arith.constant 0 : index
    %c0_72 = arith.constant 0 : index
    %125 = vector.load %arg8[%c7_70, %c0_71, %c0_72] : memref<8x32x128xf32, #tpu.memory_space<vmem>>, vector<1x32x128xf32>
    %126 = vector.shape_cast %125 : vector<1x32x128xf32> to vector<32x128xf32>
    %127 = vector.shape_cast %124 : vector<32x128xf32> to vector<1x32x128xf32>
    tpu.vector_store %arg8[%c7_70, %c0_71, %c0_72], %127 {strides = array<i32>} : memref<8x32x128xf32, #tpu.memory_space<vmem>>, vector<1x32x128xf32>,
    return
  }
}

</mosaic_0001>

<llo_original>
// kernel: resnet_block.1
$region0: #{resnet_block.1}
  #allocation0 [shape = 'u32[]', space=smem, size = 0x4, offset = 0x4, fixed_abs, tag = 'smem constant byte address 0x4 - core index']
  #allocation1 [shape = 'u32[144,128]{1,0:T(1,128)}', space=vmem, size = 0x12000, scoped, tag = 'internal scratch']
  %s0 = inlined_call_operand.vmem [shape: f32[8,32,128], index: 0, kind: input, shape index: {}]
  %s1 = inlined_call_operand.vmem [shape: f32[32,96], index: 1, kind: input, shape index: {}]
  %s2 = inlined_call_operand.vmem [shape: f32[32,96], index: 2, kind: input, shape index: {}]
  %s3 = inlined_call_operand.vmem [shape: f32[32,1], index: 3, kind: input, shape index: {}]
  %s4 = inlined_call_operand.vmem [shape: f32[32,1], index: 4, kind: input, shape index: {}]
  %s5 = inlined_call_operand.vmem [shape: f32[32,1], index: 5, kind: input, shape index: {}]
  %s6 = inlined_call_operand.vmem [shape: f32[32,1], index: 6, kind: input, shape index: {}]
  %s7 = inlined_call_operand.vmem [shape: f32[3,1024], index: 7, kind: input, shape index: {}]
  %s8 = inlined_call_operand.hbm [shape: f32[8,32,128], index: 8, kind: output, shape index: {}]
  %s9 = sld [smem:[#allocation0]]
  $region42: #{resnet_block.1} parent=0
    _
  %s11 = ssub.s32 1, %s9
  %s12 = scalar_select 0, %s11, %s9
  $region1: #{resnet_block.1} parent=0
    #allocation2 [shape = 'u8[131072]{0}', space=vmem, size = 0x20000, scoped, tag = 'output window, operand 0, single buffered']
    #allocation3 [shape = 's32[1]{0}', space=sflag, size = 0x4, scoped, tag = 'scoped memory for resnet_block.1']
    %13 = vsyncpa [#allocation3], 0
    // Predicated region
    $region2: #{resnet_block.1} parent=1 // pred_check
      _
    $region3: #{resnet_block.1} parent=1 // pred_check_branch
      %15 = sbr.rel (0) target = $region5
    $region4: #{resnet_block.1} parent=1 // pred_region
      _
    $region5: #{resnet_block.1} parent=1 // pred_fallthru
      _
    // Predicated region
    $region6: #{resnet_block.1} parent=1 // pred_check
      _
    $region7: #{resnet_block.1} parent=1 // pred_check_branch
      %17 = sbr.rel (0) target = $region9
    $region8: #{resnet_block.1} parent=1 // pred_region
      _
    $region9: #{resnet_block.1} parent=1 // pred_fallthru
      _
    // Predicated region
    $region10: #{resnet_block.1} parent=1 // pred_check
      _
    $region11: #{resnet_block.1} parent=1 // pred_check_branch
      %19 = sbr.rel (0) target = $region13
    $region12: #{resnet_block.1} parent=1 // pred_region
      _
    $region13: #{resnet_block.1} parent=1 // pred_fallthru
      _
    // Predicated region
    $region14: #{resnet_block.1} parent=1 // pred_check
      _
    $region15: #{resnet_block.1} parent=1 // pred_check_branch
      %21 = sbr.rel (0) target = $region17
    $region16: #{resnet_block.1} parent=1 // pred_region
      _
    $region17: #{resnet_block.1} parent=1 // pred_fallthru
      _
    // Predicated region
    $region18: #{resnet_block.1} parent=1 // pred_check
      _
    $region19: #{resnet_block.1} parent=1 // pred_check_branch
      %23 = sbr.rel (0) target = $region21
    $region20: #{resnet_block.1} parent=1 // pred_region
      _
    $region21: #{resnet_block.1} parent=1 // pred_fallthru
      _
    // Predicated region
    $region22: #{resnet_block.1} parent=1 // pred_check
      _
    $region23: #{resnet_block.1} parent=1 // pred_check_branch
      %25 = sbr.rel (0) target = $region25
    $region24: #{resnet_block.1} parent=1 // pred_region
      _
    $region25: #{resnet_block.1} parent=1 // pred_fallthru
      _
    // Predicated region
    $region26: #{resnet_block.1} parent=1 // pred_check
      _
    $region27: #{resnet_block.1} parent=1 // pred_check_branch
      %27 = sbr.rel (0) target = $region29
    $region28: #{resnet_block.1} parent=1 // pred_region
      _
    $region29: #{resnet_block.1} parent=1 // pred_fallthru
      _
    // Predicated region
    $region30: #{resnet_block.1} parent=1 // pred_check
      _
    $region31: #{resnet_block.1} parent=1 // pred_check_branch
      %29 = sbr.rel (0) target = $region33
    $region32: #{resnet_block.1} parent=1 // pred_region
      _
    $region33: #{resnet_block.1} parent=1 // pred_fallthru
      _
    %v30 = vld [vmem:[%s0] sm:$0xff]
    %v31 = vld [vmem:[%s0 + $0x8] sm:$0xff]
    %v32 = vld [vmem:[%s0 + $0x10] sm:$0xff]
    %v33 = vld [vmem:[%s0 + $0x18] sm:$0xff]
    %s34 = scalar_lea.vmem %s0, 32
    %v35 = vld [vmem:[%s34] sm:$0xff]
    %v36 = vld [vmem:[%s34 + $0x8] sm:$0xff]
    %v37 = vld [vmem:[%s34 + $0x10] sm:$0xff]
    %v38 = vld [vmem:[%s34 + $0x18] sm:$0xff]
    %s39 = scalar_lea.vmem %s0, 64
    %v40 = vld [vmem:[%s39] sm:$0xff]
    %v41 = vld [vmem:[%s39 + $0x8] sm:$0xff]
    %v42 = vld [vmem:[%s39 + $0x10] sm:$0xff]
    %v43 = vld [vmem:[%s39 + $0x18] sm:$0xff]
    %s44 = scalar_lea.vmem %s0, 96
    %v45 = vld [vmem:[%s44] sm:$0xff]
    %v46 = vld [vmem:[%s44 + $0x8] sm:$0xff]
    %v47 = vld [vmem:[%s44 + $0x10] sm:$0xff]
    %v48 = vld [vmem:[%s44 + $0x18] sm:$0xff]
    %s49 = scalar_lea.vmem %s0, 128
    %v50 = vld [vmem:[%s49] sm:$0xff]
    %v51 = vld [vmem:[%s49 + $0x8] sm:$0xff]
    %v52 = vld [vmem:[%s49 + $0x10] sm:$0xff]
    %v53 = vld [vmem:[%s49 + $0x18] sm:$0xff]
    %s54 = scalar_lea.vmem %s0, 160
    %v55 = vld [vmem:[%s54] sm:$0xff]
    %v56 = vld [vmem:[%s54 + $0x8] sm:$0xff]
    %v57 = vld [vmem:[%s54 + $0x10] sm:$0xff]
    %v58 = vld [vmem:[%s54 + $0x18] sm:$0xff]
    %s59 = scalar_lea.vmem %s0, 192
    %v60 = vld [vmem:[%s59] sm:$0xff]
    %v61 = vld [vmem:[%s59 + $0x8] sm:$0xff]
    %v62 = vld [vmem:[%s59 + $0x10] sm:$0xff]
    %v63 = vld [vmem:[%s59 + $0x18] sm:$0xff]
    %s64 = scalar_lea.vmem %s0, 224
    %v65 = vld [vmem:[%s64] sm:$0xff]
    %v66 = vld [vmem:[%s64 + $0x8] sm:$0xff]
    %v67 = vld [vmem:[%s64 + $0x10] sm:$0xff]
    %v68 = vld [vmem:[%s64 + $0x18] sm:$0xff]
    %v69 = vld [vmem:[%s1] sm:$0xff]
    %v70 = vld [vmem:[%s1 + $0x8] sm:$0xff]
    %v71 = vld [vmem:[%s1 + $0x10] sm:$0xff]
    %v72 = vld [vmem:[%s1 + $0x18] sm:$0xff]
    %v73 = vld [vmem:[%s7] sm:$0x77]
    %v74 = vld [vmem:[%s7 + $0x8] sm:$0x77]
    %v75 = vld [vmem:[%s7 + $0x10] sm:$0x77]
    %v76 = vld [vmem:[%s7 + $0x18] sm:$0x77]
    %77 = vrot.lane.b32.xlu0 %v30, 1
    %v78 = vpop.permute.xlu0 %77
    %79 = vrot.lane.b32.xlu0 %v31, 1
    %v80 = vpop.permute.xlu0 %79
    %81 = vrot.lane.b32.xlu0 %v32, 1
    %v82 = vpop.permute.xlu0 %81
    %83 = vrot.lane.b32.xlu0 %v33, 1
    %v84 = vpop.permute.xlu0 %83
    %85 = vrot.lane.b32.xlu0 %v35, 1
    %v86 = vpop.permute.xlu0 %85
    %87 = vrot.lane.b32.xlu0 %v36, 1
    %v88 = vpop.permute.xlu0 %87
    %89 = vrot.lane.b32.xlu0 %v37, 1
    %v90 = vpop.permute.xlu0 %89
    %91 = vrot.lane.b32.xlu0 %v38, 1
    %v92 = vpop.permute.xlu0 %91
    %93 = vrot.lane.b32.xlu0 %v40, 1
    %v94 = vpop.permute.xlu0 %93
    %95 = vrot.lane.b32.xlu0 %v41, 1
    %v96 = vpop.permute.xlu0 %95
    %97 = vrot.lane.b32.xlu0 %v42, 1
    %v98 = vpop.permute.xlu0 %97
    %99 = vrot.lane.b32.xlu0 %v43, 1
    %v100 = vpop.permute.xlu0 %99
    %101 = vrot.lane.b32.xlu0 %v45, 1
    %v102 = vpop.permute.xlu0 %101
    %103 = vrot.lane.b32.xlu0 %v46, 1
    %v104 = vpop.permute.xlu0 %103
    %105 = vrot.lane.b32.xlu0 %v47, 1
    %v106 = vpop.permute.xlu0 %105
    %107 = vrot.lane.b32.xlu0 %v48, 1
    %v108 = vpop.permute.xlu0 %107
    %109 = vrot.lane.b32.xlu0 %v50, 1
    %v110 = vpop.permute.xlu0 %109
    %111 = vrot.lane.b32.xlu0 %v51, 1
    %v112 = vpop.permute.xlu0 %111
    %113 = vrot.lane.b32.xlu0 %v52, 1
    %v114 = vpop.permute.xlu0 %113
    %115 = vrot.lane.b32.xlu0 %v53, 1
    %v116 = vpop.permute.xlu0 %115
    %117 = vrot.lane.b32.xlu0 %v55, 1
    %v118 = vpop.permute.xlu0 %117
    %119 = vrot.lane.b32.xlu0 %v56, 1
    %v120 = vpop.permute.xlu0 %119
    %121 = vrot.lane.b32.xlu0 %v57, 1
    %v122 = vpop.permute.xlu0 %121
    %123 = vrot.lane.b32.xlu0 %v58, 1
    %v124 = vpop.permute.xlu0 %123
    %125 = vrot.lane.b32.xlu0 %v60, 1
    %v126 = vpop.permute.xlu0 %125
    %127 = vrot.lane.b32.xlu0 %v61, 1
    %v128 = vpop.permute.xlu0 %127
    %129 = vrot.lane.b32.xlu0 %v62, 1
    %v130 = vpop.permute.xlu0 %129
    %131 = vrot.lane.b32.xlu0 %v63, 1
    %v132 = vpop.permute.xlu0 %131
    %133 = vrot.lane.b32.xlu0 %v65, 1
    %v134 = vpop.permute.xlu0 %133
    %135 = vrot.lane.b32.xlu0 %v66, 1
    %v136 = vpop.permute.xlu0 %135
    %137 = vrot.lane.b32.xlu0 %v67, 1
    %v138 = vpop.permute.xlu0 %137
    %139 = vrot.lane.b32.xlu0 %v68, 1
    %v140 = vpop.permute.xlu0 %139
    %v141 = vlaneseq
    %v142 = vand.u32 %v141, 127
    %vm143 = vcmp.lt.s32.totalorder %v142, 1
    %v144 = vsel %vm143, %v126, %v134
    %v145 = vsel %vm143, %v128, %v136
    %v146 = vsel %vm143, %v130, %v138
    %v147 = vsel %vm143, %v132, %v140
    %v148 = vsel %vm143, %v118, %v126
    %v149 = vsel %vm143, %v120, %v128
    %v150 = vsel %vm143, %v122, %v130
    %v151 = vsel %vm143, %v124, %v132
    %v152 = vsel %vm143, %v110, %v118
    %v153 = vsel %vm143, %v112, %v120
    %v154 = vsel %vm143, %v114, %v122
    %v155 = vsel %vm143, %v116, %v124
    %v156 = vsel %vm143, %v102, %v110
    %v157 = vsel %vm143, %v104, %v112
    %v158 = vsel %vm143, %v106, %v114
    %v159 = vsel %vm143, %v108, %v116
    %v160 = vsel %vm143, %v94, %v102
    %v161 = vsel %vm143, %v96, %v104
    %v162 = vsel %vm143, %v98, %v106
    %v163 = vsel %vm143, %v100, %v108
    %v164 = vsel %vm143, %v86, %v94
    %v165 = vsel %vm143, %v88, %v96
    %v166 = vsel %vm143, %v90, %v98
    %v167 = vsel %vm143, %v92, %v100
    %v168 = vsel %vm143, %v78, %v86
    %v169 = vsel %vm143, %v80, %v88
    %v170 = vsel %vm143, %v82, %v90
    %v171 = vsel %vm143, %v84, %v92
    %v172 = vsel %vm143, %v134, %v78
    %v173 = vsel %vm143, %v136, %v80
    %v174 = vsel %vm143, %v138, %v82
    %v175 = vsel %vm143, %v140, %v84
    %v180 = vlaneseq
    %v181 = vshrl.u32 %v180, 7
    %v182 = vsub.s32 0, %v181
    %v183 = vrot.slane %v73, %v182
    %v184 = vlaneseq
    %v185 = vshrl.u32 %v184, 7
    %v186 = vsub.s32 4, %v185
    %v187 = vrot.slane %v73, %v186
    %v188 = vlaneseq
    %v189 = vshrl.u32 %v188, 7
    %v190 = vsub.s32 0, %v189
    %v191 = vrot.slane %v74, %v190
    %v192 = vlaneseq
    %v193 = vshrl.u32 %v192, 7
    %v194 = vsub.s32 4, %v193
    %v195 = vrot.slane %v74, %v194
    %v196 = vlaneseq
    %v197 = vshrl.u32 %v196, 7
    %v198 = vsub.s32 0, %v197
    %v199 = vrot.slane %v75, %v198
    %v200 = vlaneseq
    %v201 = vshrl.u32 %v200, 7
    %v202 = vsub.s32 4, %v201
    %v203 = vrot.slane %v75, %v202
    %v204 = vlaneseq
    %v205 = vshrl.u32 %v204, 7
    %v206 = vsub.s32 0, %v205
    %v207 = vrot.slane %v76, %v206
    %v208 = vlaneseq
    %v209 = vshrl.u32 %v208, 7
    %v210 = vsub.s32 4, %v209
    %v211 = vrot.slane %v76, %v210
    %v220 = vlaneseq
    %v221 = vshrl.u32 %v220, 7
    %v222 = vsub.s32 0, %v221
    %v223 = vrot.slane %v183, %v222
    %v224 = vlaneseq
    %v225 = vshrl.u32 %v224, 7
    %v226 = vsub.s32 0, %v225
    %v227 = vrot.slane %v187, %v226
    %v228 = vlaneseq
    %v229 = vshrl.u32 %v228, 7
    %v230 = vsub.s32 0, %v229
    %v231 = vrot.slane %v191, %v230
    %v232 = vlaneseq
    %v233 = vshrl.u32 %v232, 7
    %v234 = vsub.s32 0, %v233
    %v235 = vrot.slane %v195, %v234
    %v236 = vlaneseq
    %v237 = vshrl.u32 %v236, 7
    %v238 = vsub.s32 0, %v237
    %v239 = vrot.slane %v199, %v238
    %v240 = vlaneseq
    %v241 = vshrl.u32 %v240, 7
    %v242 = vsub.s32 0, %v241
    %v243 = vrot.slane %v203, %v242
    %v244 = vlaneseq
    %v245 = vshrl.u32 %v244, 7
    %v246 = vsub.s32 0, %v245
    %v247 = vrot.slane %v207, %v246
    %v248 = vlaneseq
    %v249 = vshrl.u32 %v248, 7
    %v250 = vsub.s32 0, %v249
    %v251 = vrot.slane %v211, %v250
    %v252 = vmul.f32 %v172, %v223
    %v253 = vmul.f32 %v168, %v227
    %v254 = vmul.f32 %v164, %v231
    %v255 = vmul.f32 %v160, %v235
    %v256 = vmul.f32 %v156, %v239
    %v257 = vmul.f32 %v152, %v243
    %v258 = vmul.f32 %v148, %v247
    %v259 = vmul.f32 %v144, %v251
    %v260 = vmul.f32 %v173, %v223
    %v261 = vmul.f32 %v169, %v227
    %v262 = vmul.f32 %v165, %v231
    %v263 = vmul.f32 %v161, %v235
    %v264 = vmul.f32 %v157, %v239
    %v265 = vmul.f32 %v153, %v243
    %v266 = vmul.f32 %v149, %v247
    %v267 = vmul.f32 %v145, %v251
    %v268 = vmul.f32 %v174, %v223
    %v269 = vmul.f32 %v170, %v227
    %v270 = vmul.f32 %v166, %v231
    %v271 = vmul.f32 %v162, %v235
    %v272 = vmul.f32 %v158, %v239
    %v273 = vmul.f32 %v154, %v243
    %v274 = vmul.f32 %v150, %v247
    %v275 = vmul.f32 %v146, %v251
    %v276 = vmul.f32 %v175, %v223
    %v277 = vmul.f32 %v171, %v227
    %v278 = vmul.f32 %v167, %v231
    %v279 = vmul.f32 %v163, %v235
    %v280 = vmul.f32 %v159, %v239
    %v281 = vmul.f32 %v155, %v243
    %v282 = vmul.f32 %v151, %v247
    %v283 = vmul.f32 %v147, %v251
    %284 = vrot.lane.b32.xlu0 %v30, 127
    %v285 = vpop.permute.xlu0 %284
    %286 = vrot.lane.b32.xlu0 %v31, 127
    %v287 = vpop.permute.xlu0 %286
    %288 = vrot.lane.b32.xlu0 %v32, 127
    %v289 = vpop.permute.xlu0 %288
    %290 = vrot.lane.b32.xlu0 %v33, 127
    %v291 = vpop.permute.xlu0 %290
    %292 = vrot.lane.b32.xlu0 %v35, 127
    %v293 = vpop.permute.xlu0 %292
    %294 = vrot.lane.b32.xlu0 %v36, 127
    %v295 = vpop.permute.xlu0 %294
    %296 = vrot.lane.b32.xlu0 %v37, 127
    %v297 = vpop.permute.xlu0 %296
    %298 = vrot.lane.b32.xlu0 %v38, 127
    %v299 = vpop.permute.xlu0 %298
    %300 = vrot.lane.b32.xlu0 %v40, 127
    %v301 = vpop.permute.xlu0 %300
    %302 = vrot.lane.b32.xlu0 %v41, 127
    %v303 = vpop.permute.xlu0 %302
    %304 = vrot.lane.b32.xlu0 %v42, 127
    %v305 = vpop.permute.xlu0 %304
    %306 = vrot.lane.b32.xlu0 %v43, 127
    %v307 = vpop.permute.xlu0 %306
    %308 = vrot.lane.b32.xlu0 %v45, 127
    %v309 = vpop.permute.xlu0 %308
    %310 = vrot.lane.b32.xlu0 %v46, 127
    %v311 = vpop.permute.xlu0 %310
    %312 = vrot.lane.b32.xlu0 %v47, 127
    %v313 = vpop.permute.xlu0 %312
    %314 = vrot.lane.b32.xlu0 %v48, 127
    %v315 = vpop.permute.xlu0 %314
    %316 = vrot.lane.b32.xlu0 %v50, 127
    %v317 = vpop.permute.xlu0 %316
    %318 = vrot.lane.b32.xlu0 %v51, 127
    %v319 = vpop.permute.xlu0 %318
    %320 = vrot.lane.b32.xlu0 %v52, 127
    %v321 = vpop.permute.xlu0 %320
    %322 = vrot.lane.b32.xlu0 %v53, 127
    %v323 = vpop.permute.xlu0 %322
    %324 = vrot.lane.b32.xlu0 %v55, 127
    %v325 = vpop.permute.xlu0 %324
    %326 = vrot.lane.b32.xlu0 %v56, 127
    %v327 = vpop.permute.xlu0 %326
    %328 = vrot.lane.b32.xlu0 %v57, 127
    %v329 = vpop.permute.xlu0 %328
    %330 = vrot.lane.b32.xlu0 %v58, 127
    %v331 = vpop.permute.xlu0 %330
    %332 = vrot.lane.b32.xlu0 %v60, 127
    %v333 = vpop.permute.xlu0 %332
    %334 = vrot.lane.b32.xlu0 %v61, 127
    %v335 = vpop.permute.xlu0 %334
    %336 = vrot.lane.b32.xlu0 %v62, 127
    %v337 = vpop.permute.xlu0 %336
    %338 = vrot.lane.b32.xlu0 %v63, 127
    %v339 = vpop.permute.xlu0 %338
    %340 = vrot.lane.b32.xlu0 %v65, 127
    %v341 = vpop.permute.xlu0 %340
    %342 = vrot.lane.b32.xlu0 %v66, 127
    %v343 = vpop.permute.xlu0 %342
    %344 = vrot.lane.b32.xlu0 %v67, 127
    %v345 = vpop.permute.xlu0 %344
    %346 = vrot.lane.b32.xlu0 %v68, 127
    %v347 = vpop.permute.xlu0 %346
    %vm348 = vcmp.lt.s32.totalorder %v142, 127
    %v349 = vsel %vm348, %v333, %v341
    %v350 = vsel %vm348, %v335, %v343
    %v351 = vsel %vm348, %v337, %v345
    %v352 = vsel %vm348, %v339, %v347
    %v353 = vsel %vm348, %v325, %v333
    %v354 = vsel %vm348, %v327, %v335
    %v355 = vsel %vm348, %v329, %v337
    %v356 = vsel %vm348, %v331, %v339
    %v357 = vsel %vm348, %v317, %v325
    %v358 = vsel %vm348, %v319, %v327
    %v359 = vsel %vm348, %v321, %v329
    %v360 = vsel %vm348, %v323, %v331
    %v361 = vsel %vm348, %v309, %v317
    %v362 = vsel %vm348, %v311, %v319
    %v363 = vsel %vm348, %v313, %v321
    %v364 = vsel %vm348, %v315, %v323
    %v365 = vsel %vm348, %v301, %v309
    %v366 = vsel %vm348, %v303, %v311
    %v367 = vsel %vm348, %v305, %v313
    %v368 = vsel %vm348, %v307, %v315
    %v369 = vsel %vm348, %v293, %v301
    %v370 = vsel %vm348, %v295, %v303
    %v371 = vsel %vm348, %v297, %v305
    %v372 = vsel %vm348, %v299, %v307
    %v373 = vsel %vm348, %v285, %v293
    %v374 = vsel %vm348, %v287, %v295
    %v375 = vsel %vm348, %v289, %v297
    %v376 = vsel %vm348, %v291, %v299
    %v377 = vsel %vm348, %v341, %v285
    %v378 = vsel %vm348, %v343, %v287
    %v379 = vsel %vm348, %v345, %v289
    %v380 = vsel %vm348, %v347, %v291
    %v381 = vlaneseq
    %v382 = vshrl.u32 %v381, 7
    %v383 = vsub.s32 2, %v382
    %v384 = vrot.slane %v73, %v383
    %v385 = vlaneseq
    %v386 = vshrl.u32 %v385, 7
    %v387 = vsub.s32 6, %v386
    %v388 = vrot.slane %v73, %v387
    %v389 = vlaneseq
    %v390 = vshrl.u32 %v389, 7
    %v391 = vsub.s32 2, %v390
    %v392 = vrot.slane %v74, %v391
    %v393 = vlaneseq
    %v394 = vshrl.u32 %v393, 7
    %v395 = vsub.s32 6, %v394
    %v396 = vrot.slane %v74, %v395
    %v397 = vlaneseq
    %v398 = vshrl.u32 %v397, 7
    %v399 = vsub.s32 2, %v398
    %v400 = vrot.slane %v75, %v399
    %v401 = vlaneseq
    %v402 = vshrl.u32 %v401, 7
    %v403 = vsub.s32 6, %v402
    %v404 = vrot.slane %v75, %v403
    %v405 = vlaneseq
    %v406 = vshrl.u32 %v405, 7
    %v407 = vsub.s32 2, %v406
    %v408 = vrot.slane %v76, %v407
    %v409 = vlaneseq
    %v410 = vshrl.u32 %v409, 7
    %v411 = vsub.s32 6, %v410
    %v412 = vrot.slane %v76, %v411
    %v421 = vlaneseq
    %v422 = vshrl.u32 %v421, 7
    %v423 = vsub.s32 2, %v422
    %v424 = vrot.slane %v384, %v423
    %v425 = vlaneseq
    %v426 = vshrl.u32 %v425, 7
    %v427 = vsub.s32 2, %v426
    %v428 = vrot.slane %v388, %v427
    %v429 = vlaneseq
    %v430 = vshrl.u32 %v429, 7
    %v431 = vsub.s32 2, %v430
    %v432 = vrot.slane %v392, %v431
    %v433 = vlaneseq
    %v434 = vshrl.u32 %v433, 7
    %v435 = vsub.s32 2, %v434
    %v436 = vrot.slane %v396, %v435
    %v437 = vlaneseq
    %v438 = vshrl.u32 %v437, 7
    %v439 = vsub.s32 2, %v438
    %v440 = vrot.slane %v400, %v439
    %v441 = vlaneseq
    %v442 = vshrl.u32 %v441, 7
    %v443 = vsub.s32 2, %v442
    %v444 = vrot.slane %v404, %v443
    %v445 = vlaneseq
    %v446 = vshrl.u32 %v445, 7
    %v447 = vsub.s32 2, %v446
    %v448 = vrot.slane %v408, %v447
    %v449 = vlaneseq
    %v450 = vshrl.u32 %v449, 7
    %v451 = vsub.s32 2, %v450
    %v452 = vrot.slane %v412, %v451
    %v453 = vmul.f32 %v373, %v424
    %v454 = vmul.f32 %v369, %v428
    %v455 = vmul.f32 %v365, %v432
    %v456 = vmul.f32 %v361, %v436
    %v457 = vmul.f32 %v357, %v440
    %v458 = vmul.f32 %v353, %v444
    %v459 = vmul.f32 %v349, %v448
    %v460 = vmul.f32 %v377, %v452
    %v461 = vmul.f32 %v374, %v424
    %v462 = vmul.f32 %v370, %v428
    %v463 = vmul.f32 %v366, %v432
    %v464 = vmul.f32 %v362, %v436
    %v465 = vmul.f32 %v358, %v440
    %v466 = vmul.f32 %v354, %v444
    %v467 = vmul.f32 %v350, %v448
    %v468 = vmul.f32 %v378, %v452
    %v469 = vmul.f32 %v375, %v424
    %v470 = vmul.f32 %v371, %v428
    %v471 = vmul.f32 %v367, %v432
    %v472 = vmul.f32 %v363, %v436
    %v473 = vmul.f32 %v359, %v440
    %v474 = vmul.f32 %v355, %v444
    %v475 = vmul.f32 %v351, %v448
    %v476 = vmul.f32 %v379, %v452
    %v477 = vmul.f32 %v376, %v424
    %v478 = vmul.f32 %v372, %v428
    %v479 = vmul.f32 %v368, %v432
    %v480 = vmul.f32 %v364, %v436
    %v481 = vmul.f32 %v360, %v440
    %v482 = vmul.f32 %v356, %v444
    %v483 = vmul.f32 %v352, %v448
    %v484 = vmul.f32 %v380, %v452
    %vm485 = vcmask 785408
    %v487 = vsel %vm485, %v69, 0
    %v490 = vsel %vm485, %v70, 0
    %v493 = vsel %vm485, %v71, 0
    %v496 = vsel %vm485, %v72, 0
    %498 = vmatprep.subr.mxu0 %v253
    %499 = vmatpush1.msra.mxu0 %v252
    %500 = vmatprep.subr.mxu0 %v261
    %501 = vmatpush1.msra.mxu0 %v260
    %502 = vmatprep.subr.mxu0 %v269
    %503 = vmatpush1.msra.mxu0 %v268
    %504 = vmatprep.subr.mxu0 %v277
    %505 = vmatpush1.msra.mxu0 %v276
    %506 = vmatprep.subr.mxu0 %v35
    %507 = vmatpush1.msra.mxu0 %v30
    %508 = vmatprep.subr.mxu0 %v36
    %509 = vmatpush1.msra.mxu0 %v31
    %510 = vmatprep.subr.mxu0 %v37
    %511 = vmatpush1.msra.mxu0 %v32
    %512 = vmatprep.subr.mxu0 %v38
    %513 = vmatpush1.msra.mxu0 %v33
    %514 = vmatprep.subr.mxu0 %v454
    %515 = vmatpush1.msra.mxu0 %v453
    %516 = vmatprep.subr.mxu0 %v462
    %517 = vmatpush1.msra.mxu0 %v461
    %518 = vmatprep.subr.mxu0 %v470
    %519 = vmatpush1.msra.mxu0 %v469
    %520 = vmatprep.subr.mxu0 %v478
    %521 = vmatpush1.msra.mxu0 %v477
    %522 = vmatprep.subr.mxu0 0.0
    %523 = vmatpush1.msra.mxu0 0.0
    %524 = vmatprep.subr.mxu0 0.0
    %525 = vmatpush1.msra.mxu0 0.0
    %526 = vmatprep.subr.mxu0 0.0
    %527 = vmatpush1.msra.mxu0 0.0
    %528 = vmatprep.subr.mxu0 0.0
    %529 = vmatpush1.msra.mxu0 0.0
    %530 = vmatprep.subr.mxu0 0.0
    %531 = vmatpush1.msra.mxu0 0.0
    %532 = vmatprep.subr.mxu0 0.0
    %533 = vmatpush1.msra.mxu0 0.0
    %534 = vmatprep.subr.mxu0 0.0
    %535 = vmatpush1.msra.mxu0 0.0
    %536 = vmatprep.subr.mxu0 0.0
    %537 = vmatpush1.msra.mxu0 0.0
    %538 = vmatprep.subr.mxu0 0.0
    %539 = vmatpush1.msra.mxu0 0.0
    %540 = vmatprep.subr.mxu0 0.0
    %541 = vmatpush1.msra.mxu0 0.0
    %542 = vmatprep.subr.mxu0 0.0
    %543 = vmatpush1.msra.mxu0 0.0
    %544 = vmatprep.subr.mxu0 0.0
    %545 = vmatpush1.msra.mxu0 0.0
    %546 = vmatprep.subr.mxu0 0.0
    %547 = vmatpush1.msra.mxu0 0.0
    %548 = vmatprep.subr.mxu0 0.0
    %549 = vmatpush1.msra.mxu0 0.0
    %550 = vmatprep.subr.mxu0 0.0
    %551 = vmatpush1.msra.mxu0 0.0
    %552 = vmatprep.subr.mxu0 0.0
    %553 = vmatpush1.msra.mxu0 0.0
    %554 = vmatprep.subr.mxu0 0.0
    %555 = vmatpush1.msra.mxu0 0.0
    %556 = vmatprep.subr.mxu0 0.0
    %557 = vmatpush1.msra.mxu0 0.0
    %558 = vmatprep.subr.mxu0 0.0
    %559 = vmatpush1.msra.mxu0 0.0
    %560 = vmatprep.subr.mxu0 0.0
    %561 = vmatpush1.msra.mxu0 0.0
    %562 = vmatprep.mubr.f32.mxu0 0.0
    %563 = vmatmul.mubr.f32.gmra.mrb[0].mxu0 %v487
    %v564 = vpop.f32.mrb[0].mxu0
    %v565 = vadd.f32 0.0, %v564
    %v566 = vpop.f32.mrb[0].mxu0
    %v567 = vadd.f32 0.0, %v566
    %568 = vmatprep.mubr.f32.mxu0 0.0
    %569 = vmatmul.mubr.f32.gmra.mrb[0].mxu0 %v490
    %v570 = vpop.f32.mrb[0].mxu0
    %v571 = vadd.f32 0.0, %v570
    %v572 = vpop.f32.mrb[0].mxu0
    %v573 = vadd.f32 0.0, %v572
    %574 = vmatprep.mubr.f32.mxu0 0.0
    %575 = vmatmul.mubr.f32.gmra.mrb[0].mxu0 %v493
    %v576 = vpop.f32.mrb[0].mxu0
    %v577 = vadd.f32 0.0, %v576
    %v578 = vpop.f32.mrb[0].mxu0
    %v579 = vadd.f32 0.0, %v578
    %580 = vmatprep.mubr.f32.mxu0 0.0
    %581 = vmatmul.mubr.f32.gmra.mrb[0].mxu0 %v496
    %v582 = vpop.f32.mrb[0].mxu0
    %v583 = vadd.f32 0.0, %v582
    %v584 = vpop.f32.mrb[0].mxu0
    %v585 = vadd.f32 0.0, %v584
    %586 = vdwg.mxu0
    %587 = vmatprep.subr.mxu0 %v255
    %588 = vmatpush1.msra.mxu0 %v254
    %589 = vmatprep.subr.mxu0 %v263
    %590 = vmatpush1.msra.mxu0 %v262
    %591 = vmatprep.subr.mxu0 %v271
    %592 = vmatpush1.msra.mxu0 %v270
    %593 = vmatprep.subr.mxu0 %v279
    %594 = vmatpush1.msra.mxu0 %v278
    %595 = vmatprep.subr.mxu0 %v45
    %596 = vmatpush1.msra.mxu0 %v40
    %597 = vmatprep.subr.mxu0 %v46
    %598 = vmatpush1.msra.mxu0 %v41
    %599 = vmatprep.subr.mxu0 %v47
    %600 = vmatpush1.msra.mxu0 %v42
    %601 = vmatprep.subr.mxu0 %v48
    %602 = vmatpush1.msra.mxu0 %v43
    %603 = vmatprep.subr.mxu0 %v456
    %604 = vmatpush1.msra.mxu0 %v455
    %605 = vmatprep.subr.mxu0 %v464
    %606 = vmatpush1.msra.mxu0 %v463
    %607 = vmatprep.subr.mxu0 %v472
    %608 = vmatpush1.msra.mxu0 %v471
    %609 = vmatprep.subr.mxu0 %v480
    %610 = vmatpush1.msra.mxu0 %v479
    %611 = vmatprep.subr.mxu0 0.0
    %612 = vmatpush1.msra.mxu0 0.0
    %613 = vmatprep.subr.mxu0 0.0
    %614 = vmatpush1.msra.mxu0 0.0
    %615 = vmatprep.subr.mxu0 0.0
    %616 = vmatpush1.msra.mxu0 0.0
    %617 = vmatprep.subr.mxu0 0.0
    %618 = vmatpush1.msra.mxu0 0.0
    %619 = vmatprep.subr.mxu0 0.0
    %620 = vmatpush1.msra.mxu0 0.0
    %621 = vmatprep.subr.mxu0 0.0
    %622 = vmatpush1.msra.mxu0 0.0
    %623 = vmatprep.subr.mxu0 0.0
    %624 = vmatpush1.msra.mxu0 0.0
    %625 = vmatprep.subr.mxu0 0.0
    %626 = vmatpush1.msra.mxu0 0.0
    %627 = vmatprep.subr.mxu0 0.0
    %628 = vmatpush1.msra.mxu0 0.0
    %629 = vmatprep.subr.mxu0 0.0
    %630 = vmatpush1.msra.mxu0 0.0
    %631 = vmatprep.subr.mxu0 0.0
    %632 = vmatpush1.msra.mxu0 0.0
    %633 = vmatprep.subr.mxu0 0.0
    %634 = vmatpush1.msra.mxu0 0.0
    %635 = vmatprep.subr.mxu0 0.0
    %636 = vmatpush1.msra.mxu0 0.0
    %637 = vmatprep.subr.mxu0 0.0
    %638 = vmatpush1.msra.mxu0 0.0
    %639 = vmatprep.subr.mxu0 0.0
    %640 = vmatpush1.msra.mxu0 0.0
    %641 = vmatprep.subr.mxu0 0.0
    %642 = vmatpush1.msra.mxu0 0.0
    %643 = vmatprep.subr.mxu0 0.0
    %644 = vmatpush1.msra.mxu0 0.0
    %645 = vmatprep.subr.mxu0 0.0
    %646 = vmatpush1.msra.mxu0 0.0
    %647 = vmatprep.subr.mxu0 0.0
    %648 = vmatpush1.msra.mxu0 0.0
    %649 = vmatprep.subr.mxu0 0.0
    %650 = vmatpush1.msra.mxu0 0.0
    %651 = vmatprep.mubr.f32.mxu0 0.0
    %652 = vmatmul.mubr.f32.gmra.mrb[0].mxu0 %v487
    %v653 = vpop.f32.mrb[0].mxu0
    %v654 = vadd.f32 0.0, %v653
    %v655 = vpop.f32.mrb[0].mxu0
    %v656 = vadd.f32 0.0, %v655
    %657 = vmatprep.mubr.f32.mxu0 0.0
    %658 = vmatmul.mubr.f32.gmra.mrb[0].mxu0 %v490
    %v659 = vpop.f32.mrb[0].mxu0
    %v660 = vadd.f32 0.0, %v659
    %v661 = vpop.f32.mrb[0].mxu0
    %v662 = vadd.f32 0.0, %v661
    %663 = vmatprep.mubr.f32.mxu0 0.0
    %664 = vmatmul.mubr.f32.gmra.mrb[0].mxu0 %v493
    %v665 = vpop.f32.mrb[0].mxu0
    %v666 = vadd.f32 0.0, %v665
    %v667 = vpop.f32.mrb[0].mxu0
    %v668 = vadd.f32 0.0, %v667
    %669 = vmatprep.mubr.f32.mxu0 0.0
    %670 = vmatmul.mubr.f32.gmra.mrb[0].mxu0 %v496
    %v671 = vpop.f32.mrb[0].mxu0
    %v672 = vadd.f32 0.0, %v671
    %v673 = vpop.f32.mrb[0].mxu0
    %v674 = vadd.f32 0.0, %v673
    %675 = vdwg.mxu0
    %676 = vmatprep.subr.mxu0 %v257
    %677 = vmatpush1.msra.mxu0 %v256
    %678 = vmatprep.subr.mxu0 %v265
    %679 = vmatpush1.msra.mxu0 %v264
    %680 = vmatprep.subr.mxu0 %v273
    %681 = vmatpush1.msra.mxu0 %v272
    %682 = vmatprep.subr.mxu0 %v281
    %683 = vmatpush1.msra.mxu0 %v280
    %684 = vmatprep.subr.mxu0 %v55
    %685 = vmatpush1.msra.mxu0 %v50
    %686 = vmatprep.subr.mxu0 %v56
    %687 = vmatpush1.msra.mxu0 %v51
    %688 = vmatprep.subr.mxu0 %v57
    %689 = vmatpush1.msra.mxu0 %v52
    %690 = vmatprep.subr.mxu0 %v58
    %691 = vmatpush1.msra.mxu0 %v53
    %692 = vmatprep.subr.mxu0 %v458
    %693 = vmatpush1.msra.mxu0 %v457
    %694 = vmatprep.subr.mxu0 %v466
    %695 = vmatpush1.msra.mxu0 %v465
    %696 = vmatprep.subr.mxu0 %v474
    %697 = vmatpush1.msra.mxu0 %v473
    %698 = vmatprep.subr.mxu0 %v482
    %699 = vmatpush1.msra.mxu0 %v481
    %700 = vmatprep.subr.mxu0 0.0
    %701 = vmatpush1.msra.mxu0 0.0
    %702 = vmatprep.subr.mxu0 0.0
    %703 = vmatpush1.msra.mxu0 0.0
    %704 = vmatprep.subr.mxu0 0.0
    %705 = vmatpush1.msra.mxu0 0.0
    %706 = vmatprep.subr.mxu0 0.0
    %707 = vmatpush1.msra.mxu0 0.0
    %708 = vmatprep.subr.mxu0 0.0
    %709 = vmatpush1.msra.mxu0 0.0
    %710 = vmatprep.subr.mxu0 0.0
    %711 = vmatpush1.msra.mxu0 0.0
    %712 = vmatprep.subr.mxu0 0.0
    %713 = vmatpush1.msra.mxu0 0.0
    %714 = vmatprep.subr.mxu0 0.0
    %715 = vmatpush1.msra.mxu0 0.0
    %716 = vmatprep.subr.mxu0 0.0
    %717 = vmatpush1.msra.mxu0 0.0
    %718 = vmatprep.subr.mxu0 0.0
    %719 = vmatpush1.msra.mxu0 0.0
    %720 = vmatprep.subr.mxu0 0.0
    %721 = vmatpush1.msra.mxu0 0.0
    %722 = vmatprep.subr.mxu0 0.0
    %723 = vmatpush1.msra.mxu0 0.0
    %724 = vmatprep.subr.mxu0 0.0
    %725 = vmatpush1.msra.mxu0 0.0
    %726 = vmatprep.subr.mxu0 0.0
    %727 = vmatpush1.msra.mxu0 0.0
    %728 = vmatprep.subr.mxu0 0.0
    %729 = vmatpush1.msra.mxu0 0.0
    %730 = vmatprep.subr.mxu0 0.0
    %731 = vmatpush1.msra.mxu0 0.0
    %732 = vmatprep.subr.mxu0 0.0
    %733 = vmatpush1.msra.mxu0 0.0
    %734 = vmatprep.subr.mxu0 0.0
    %735 = vmatpush1.msra.mxu0 0.0
    %736 = vmatprep.subr.mxu0 0.0
    %737 = vmatpush1.msra.mxu0 0.0
    %738 = vmatprep.subr.mxu0 0.0
    %739 = vmatpush1.msra.mxu0 0.0
    %740 = vmatprep.mubr.f32.mxu0 0.0
    %741 = vmatmul.mubr.f32.gmra.mrb[0].mxu0 %v487
    %v742 = vpop.f32.mrb[0].mxu0
    %v743 = vadd.f32 0.0, %v742
    %v744 = vpop.f32.mrb[0].mxu0
    %v745 = vadd.f32 0.0, %v744
    %746 = vmatprep.mubr.f32.mxu0 0.0
    %747 = vmatmul.mubr.f32.gmra.mrb[0].mxu0 %v490
    %v748 = vpop.f32.mrb[0].mxu0
    %v749 = vadd.f32 0.0, %v748
    %v750 = vpop.f32.mrb[0].mxu0
    %v751 = vadd.f32 0.0, %v750
    %752 = vmatprep.mubr.f32.mxu0 0.0
    %753 = vmatmul.mubr.f32.gmra.mrb[0].mxu0 %v493
    %v754 = vpop.f32.mrb[0].mxu0
    %v755 = vadd.f32 0.0, %v754
    %v756 = vpop.f32.mrb[0].mxu0
    %v757 = vadd.f32 0.0, %v756
    %758 = vmatprep.mubr.f32.mxu0 0.0
    %759 = vmatmul.mubr.f32.gmra.mrb[0].mxu0 %v496
    %v760 = vpop.f32.mrb[0].mxu0
    %v761 = vadd.f32 0.0, %v760
    %v762 = vpop.f32.mrb[0].mxu0
    %v763 = vadd.f32 0.0, %v762
    %764 = vdwg.mxu0
    %765 = vmatprep.subr.mxu0 %v259
    %766 = vmatpush1.msra.mxu0 %v258
    %767 = vmatprep.subr.mxu0 %v267
    %768 = vmatpush1.msra.mxu0 %v266
    %769 = vmatprep.subr.mxu0 %v275
    %770 = vmatpush1.msra.mxu0 %v274
    %771 = vmatprep.subr.mxu0 %v283
    %772 = vmatpush1.msra.mxu0 %v282
    %773 = vmatprep.subr.mxu0 %v65
    %774 = vmatpush1.msra.mxu0 %v60
    %775 = vmatprep.subr.mxu0 %v66
    %776 = vmatpush1.msra.mxu0 %v61
    %777 = vmatprep.subr.mxu0 %v67
    %778 = vmatpush1.msra.mxu0 %v62
    %779 = vmatprep.subr.mxu0 %v68
    %780 = vmatpush1.msra.mxu0 %v63
    %781 = vmatprep.subr.mxu0 %v460
    %782 = vmatpush1.msra.mxu0 %v459
    %783 = vmatprep.subr.mxu0 %v468
    %784 = vmatpush1.msra.mxu0 %v467
    %785 = vmatprep.subr.mxu0 %v476
    %786 = vmatpush1.msra.mxu0 %v475
    %787 = vmatprep.subr.mxu0 %v484
    %788 = vmatpush1.msra.mxu0 %v483
    %789 = vmatprep.subr.mxu0 0.0
    %790 = vmatpush1.msra.mxu0 0.0
    %791 = vmatprep.subr.mxu0 0.0
    %792 = vmatpush1.msra.mxu0 0.0
    %793 = vmatprep.subr.mxu0 0.0
    %794 = vmatpush1.msra.mxu0 0.0
    %795 = vmatprep.subr.mxu0 0.0
    %796 = vmatpush1.msra.mxu0 0.0
    %797 = vmatprep.subr.mxu0 0.0
    %798 = vmatpush1.msra.mxu0 0.0
    %799 = vmatprep.subr.mxu0 0.0
    %800 = vmatpush1.msra.mxu0 0.0
    %801 = vmatprep.subr.mxu0 0.0
    %802 = vmatpush1.msra.mxu0 0.0
    %803 = vmatprep.subr.mxu0 0.0
    %804 = vmatpush1.msra.mxu0 0.0
    %805 = vmatprep.subr.mxu0 0.0
    %806 = vmatpush1.msra.mxu0 0.0
    %807 = vmatprep.subr.mxu0 0.0
    %808 = vmatpush1.msra.mxu0 0.0
    %809 = vmatprep.subr.mxu0 0.0
    %810 = vmatpush1.msra.mxu0 0.0
    %811 = vmatprep.subr.mxu0 0.0
    %812 = vmatpush1.msra.mxu0 0.0
    %813 = vmatprep.subr.mxu0 0.0
    %814 = vmatpush1.msra.mxu0 0.0
    %815 = vmatprep.subr.mxu0 0.0
    %816 = vmatpush1.msra.mxu0 0.0
    %817 = vmatprep.subr.mxu0 0.0
    %818 = vmatpush1.msra.mxu0 0.0
    %819 = vmatprep.subr.mxu0 0.0
    %820 = vmatpush1.msra.mxu0 0.0
    %821 = vmatprep.subr.mxu0 0.0
    %822 = vmatpush1.msra.mxu0 0.0
    %823 = vmatprep.subr.mxu0 0.0
    %824 = vmatpush1.msra.mxu0 0.0
    %825 = vmatprep.subr.mxu0 0.0
    %826 = vmatpush1.msra.mxu0 0.0
    %827 = vmatprep.subr.mxu0 0.0
    %828 = vmatpush1.msra.mxu0 0.0
    %829 = vmatprep.mubr.f32.mxu0 0.0
    %830 = vmatmul.mubr.f32.gmra.mrb[0].mxu0 %v487
    %v831 = vpop.f32.mrb[0].mxu0
    %v832 = vadd.f32 0.0, %v831
    %v833 = vpop.f32.mrb[0].mxu0
    %v834 = vadd.f32 0.0, %v833
    %835 = vmatprep.mubr.f32.mxu0 0.0
    %836 = vmatmul.mubr.f32.gmra.mrb[0].mxu0 %v490
    %v837 = vpop.f32.mrb[0].mxu0
    %v838 = vadd.f32 0.0, %v837
    %v839 = vpop.f32.mrb[0].mxu0
    %v840 = vadd.f32 0.0, %v839
    %841 = vmatprep.mubr.f32.mxu0 0.0
    %842 = vmatmul.mubr.f32.gmra.mrb[0].mxu0 %v493
    %v843 = vpop.f32.mrb[0].mxu0
    %v844 = vadd.f32 0.0, %v843
    %v845 = vpop.f32.mrb[0].mxu0
    %v846 = vadd.f32 0.0, %v845
    %847 = vmatprep.mubr.f32.mxu0 0.0
    %848 = vmatmul.mubr.f32.gmra.mrb[0].mxu0 %v496
    %v849 = vpop.f32.mrb[0].mxu0
    %v850 = vadd.f32 0.0, %v849
    %v851 = vpop.f32.mrb[0].mxu0
    %v852 = vadd.f32 0.0, %v851
    %853 = vdwg.mxu0
    %v854 = vadd.f32 %v565, %v567
    %v855 = vadd.f32 %v854, %v654
    %v856 = vadd.f32 %v855, %v656
    %v857 = vadd.f32 %v856, %v743
    %v858 = vadd.f32 %v857, %v745
    %v859 = vadd.f32 %v858, %v832
    %v860 = vadd.f32 %v859, %v834
    %861 = vadd.xlane.f32.xlu0 %v860
    %v862 = vpop.xlane.xlu0 %861
    %v863 = vadd.f32 %v571, %v573
    %v864 = vadd.f32 %v863, %v660
    %v865 = vadd.f32 %v864, %v662
    %v866 = vadd.f32 %v865, %v749
    %v867 = vadd.f32 %v866, %v751
    %v868 = vadd.f32 %v867, %v838
    %v869 = vadd.f32 %v868, %v840
    %870 = vadd.xlane.f32.xlu0 %v869
    %v871 = vpop.xlane.xlu0 %870
    %v872 = vadd.f32 %v577, %v579
    %v873 = vadd.f32 %v872, %v666
    %v874 = vadd.f32 %v873, %v668
    %v875 = vadd.f32 %v874, %v755
    %v876 = vadd.f32 %v875, %v757
    %v877 = vadd.f32 %v876, %v844
    %v878 = vadd.f32 %v877, %v846
    %879 = vadd.xlane.f32.xlu0 %v878
    %v880 = vpop.xlane.xlu0 %879
    %v881 = vadd.f32 %v583, %v585
    %v882 = vadd.f32 %v881, %v672
    %v883 = vadd.f32 %v882, %v674
    %v884 = vadd.f32 %v883, %v761
    %v885 = vadd.f32 %v884, %v763
    %v886 = vadd.f32 %v885, %v850
    %v887 = vadd.f32 %v886, %v852
    %888 = vadd.xlane.f32.xlu0 %v887
    %v889 = vpop.xlane.xlu0 %888
    %v890 = vmul.f32 %v565, %v565
    %v891 = vmul.f32 %v567, %v567
    %v892 = vmul.f32 %v654, %v654
    %v893 = vmul.f32 %v656, %v656
    %v894 = vmul.f32 %v743, %v743
    %v895 = vmul.f32 %v745, %v745
    %v896 = vmul.f32 %v832, %v832
    %v897 = vmul.f32 %v834, %v834
    %v898 = vmul.f32 %v571, %v571
    %v899 = vmul.f32 %v573, %v573
    %v900 = vmul.f32 %v660, %v660
    %v901 = vmul.f32 %v662, %v662
    %v902 = vmul.f32 %v749, %v749
    %v903 = vmul.f32 %v751, %v751
    %v904 = vmul.f32 %v838, %v838
    %v905 = vmul.f32 %v840, %v840
    %v906 = vmul.f32 %v577, %v577
    %v907 = vmul.f32 %v579, %v579
    %v908 = vmul.f32 %v666, %v666
    %v909 = vmul.f32 %v668, %v668
    %v910 = vmul.f32 %v755, %v755
    %v911 = vmul.f32 %v757, %v757
    %v912 = vmul.f32 %v844, %v844
    %v913 = vmul.f32 %v846, %v846
    %v914 = vmul.f32 %v583, %v583
    %v915 = vmul.f32 %v585, %v585
    %v916 = vmul.f32 %v672, %v672
    %v917 = vmul.f32 %v674, %v674
    %v918 = vmul.f32 %v761, %v761
    %v919 = vmul.f32 %v763, %v763
    %v920 = vmul.f32 %v850, %v850
    %v921 = vmul.f32 %v852, %v852
    %v922 = vadd.f32 %v890, %v891
    %v923 = vadd.f32 %v922, %v892
    %v924 = vadd.f32 %v923, %v893
    %v925 = vadd.f32 %v924, %v894
    %v926 = vadd.f32 %v925, %v895
    %v927 = vadd.f32 %v926, %v896
    %v928 = vadd.f32 %v927, %v897
    %929 = vadd.xlane.f32.xlu0 %v928
    %v930 = vpop.xlane.xlu0 %929
    %v931 = vadd.f32 %v898, %v899
    %v932 = vadd.f32 %v931, %v900
    %v933 = vadd.f32 %v932, %v901
    %v934 = vadd.f32 %v933, %v902
    %v935 = vadd.f32 %v934, %v903
    %v936 = vadd.f32 %v935, %v904
    %v937 = vadd.f32 %v936, %v905
    %938 = vadd.xlane.f32.xlu0 %v937
    %v939 = vpop.xlane.xlu0 %938
    %v940 = vadd.f32 %v906, %v907
    %v941 = vadd.f32 %v940, %v908
    %v942 = vadd.f32 %v941, %v909
    %v943 = vadd.f32 %v942, %v910
    %v944 = vadd.f32 %v943, %v911
    %v945 = vadd.f32 %v944, %v912
    %v946 = vadd.f32 %v945, %v913
    %947 = vadd.xlane.f32.xlu0 %v946
    %v948 = vpop.xlane.xlu0 %947
    %v949 = vadd.f32 %v914, %v915
    %v950 = vadd.f32 %v949, %v916
    %v951 = vadd.f32 %v950, %v917
    %v952 = vadd.f32 %v951, %v918
    %v953 = vadd.f32 %v952, %v919
    %v954 = vadd.f32 %v953, %v920
    %v955 = vadd.f32 %v954, %v921
    %956 = vadd.xlane.f32.xlu0 %v955
    %v957 = vpop.xlane.xlu0 %956
    %v958 = vld [vmem:[%s3] sm:$0xff]
    %v959 = vld [vmem:[%s3 + $0x8] sm:$0xff]
    %v960 = vld [vmem:[%s3 + $0x10] sm:$0xff]
    %v961 = vld [vmem:[%s3 + $0x18] sm:$0xff]
    %v962 = vld [vmem:[%s4] sm:$0xff]
    %v963 = vld [vmem:[%s4 + $0x8] sm:$0xff]
    %v964 = vld [vmem:[%s4 + $0x10] sm:$0xff]
    %v965 = vld [vmem:[%s4 + $0x18] sm:$0xff]
    %v966 = vmul.f32 %v862, 0.0009765625
    %v967 = vmul.f32 %v871, 0.0009765625
    %v968 = vmul.f32 %v880, 0.0009765625
    %v969 = vmul.f32 %v889, 0.0009765625
    %v970 = vmul.f32 %v930, 0.0009765625
    %v971 = vmul.f32 %v939, 0.0009765625
    %v972 = vmul.f32 %v948, 0.0009765625
    %v973 = vmul.f32 %v957, 0.0009765625
    %v974 = vmul.f32 %v966, %v966
    %v975 = vmul.f32 %v967, %v967
    %v976 = vmul.f32 %v968, %v968
    %v977 = vmul.f32 %v969, %v969
    %v978 = vsub.f32 %v970, %v974
    %v979 = vsub.f32 %v971, %v975
    %v980 = vsub.f32 %v972, %v976
    %v981 = vsub.f32 %v973, %v977
    %v982 = vmax.f32 %v978, 0.0
    %v983 = vmax.f32 %v979, 0.0
    %v984 = vmax.f32 %v980, 0.0
    %v985 = vmax.f32 %v981, 0.0
    %v986 = vadd.f32 %v982, 1e-05
    %v987 = vadd.f32 %v983, 1e-05
    %v988 = vadd.f32 %v984, 1e-05
    %v989 = vadd.f32 %v985, 1e-05
    %v990 = vrsqrt.pop %v986
    %v991 = vrsqrt.pop %v987
    %v992 = vrsqrt.pop %v988
    %v993 = vrsqrt.pop %v989
    %v994 = vmul.f32 %v958, %v990
    %v995 = vmul.f32 %v959, %v991
    %v996 = vmul.f32 %v960, %v992
    %v997 = vmul.f32 %v961, %v993
    %v998 = vmul.f32 %v966, %v994
    %v999 = vmul.f32 %v967, %v995
    %v1000 = vmul.f32 %v968, %v996
    %v1001 = vmul.f32 %v969, %v997
    %v1002 = vsub.f32 %v962, %v998
    %v1003 = vsub.f32 %v963, %v999
    %v1004 = vsub.f32 %v964, %v1000
    %v1005 = vsub.f32 %v965, %v1001
    %1007 = vset.pattern.permute.xlu0 0
    %1008 = vperm.xlu0 %1007, %v994
    %v1009 = vpop.permute.xlu0 %1008
    %1012 = vset.pattern.permute.xlu0 0
    %1013 = vperm.xlu0 %1012, %v995
    %v1014 = vpop.permute.xlu0 %1013
    %1017 = vset.pattern.permute.xlu0 0
    %1018 = vperm.xlu0 %1017, %v996
    %v1019 = vpop.permute.xlu0 %1018
    %1022 = vset.pattern.permute.xlu0 0
    %1023 = vperm.xlu0 %1022, %v997
    %v1024 = vpop.permute.xlu0 %1023
    %v1026 = vmul.f32 %v565, %v1009
    %v1027 = vmul.f32 %v567, %v1009
    %v1028 = vmul.f32 %v654, %v1009
    %v1029 = vmul.f32 %v656, %v1009
    %v1030 = vmul.f32 %v743, %v1009
    %v1031 = vmul.f32 %v745, %v1009
    %v1032 = vmul.f32 %v832, %v1009
    %v1033 = vmul.f32 %v834, %v1009
    %v1034 = vmul.f32 %v571, %v1014
    %v1035 = vmul.f32 %v573, %v1014
    %v1036 = vmul.f32 %v660, %v1014
    %v1037 = vmul.f32 %v662, %v1014
    %v1038 = vmul.f32 %v749, %v1014
    %v1039 = vmul.f32 %v751, %v1014
    %v1040 = vmul.f32 %v838, %v1014
    %v1041 = vmul.f32 %v840, %v1014
    %v1042 = vmul.f32 %v577, %v1019
    %v1043 = vmul.f32 %v579, %v1019
    %v1044 = vmul.f32 %v666, %v1019
    %v1045 = vmul.f32 %v668, %v1019
    %v1046 = vmul.f32 %v755, %v1019
    %v1047 = vmul.f32 %v757, %v1019
    %v1048 = vmul.f32 %v844, %v1019
    %v1049 = vmul.f32 %v846, %v1019
    %v1050 = vmul.f32 %v583, %v1024
    %v1051 = vmul.f32 %v585, %v1024
    %v1052 = vmul.f32 %v672, %v1024
    %v1053 = vmul.f32 %v674, %v1024
    %v1054 = vmul.f32 %v761, %v1024
    %v1055 = vmul.f32 %v763, %v1024
    %v1056 = vmul.f32 %v850, %v1024
    %v1057 = vmul.f32 %v852, %v1024
    %1059 = vset.pattern.permute.xlu0 0
    %1060 = vperm.xlu0 %1059, %v1002
    %v1061 = vpop.permute.xlu0 %1060
    %1064 = vset.pattern.permute.xlu0 0
    %1065 = vperm.xlu0 %1064, %v1003
    %v1066 = vpop.permute.xlu0 %1065
    %1069 = vset.pattern.permute.xlu0 0
    %1070 = vperm.xlu0 %1069, %v1004
    %v1071 = vpop.permute.xlu0 %1070
    %1074 = vset.pattern.permute.xlu0 0
    %1075 = vperm.xlu0 %1074, %v1005
    %v1076 = vpop.permute.xlu0 %1075
    %v1078 = vadd.f32 %v1026, %v1061
    %v1079 = vadd.f32 %v1027, %v1061
    %v1080 = vadd.f32 %v1028, %v1061
    %v1081 = vadd.f32 %v1029, %v1061
    %v1082 = vadd.f32 %v1030, %v1061
    %v1083 = vadd.f32 %v1031, %v1061
    %v1084 = vadd.f32 %v1032, %v1061
    %v1085 = vadd.f32 %v1033, %v1061
    %v1086 = vadd.f32 %v1034, %v1066
    %v1087 = vadd.f32 %v1035, %v1066
    %v1088 = vadd.f32 %v1036, %v1066
    %v1089 = vadd.f32 %v1037, %v1066
    %v1090 = vadd.f32 %v1038, %v1066
    %v1091 = vadd.f32 %v1039, %v1066
    %v1092 = vadd.f32 %v1040, %v1066
    %v1093 = vadd.f32 %v1041, %v1066
    %v1094 = vadd.f32 %v1042, %v1071
    %v1095 = vadd.f32 %v1043, %v1071
    %v1096 = vadd.f32 %v1044, %v1071
    %v1097 = vadd.f32 %v1045, %v1071
    %v1098 = vadd.f32 %v1046, %v1071
    %v1099 = vadd.f32 %v1047, %v1071
    %v1100 = vadd.f32 %v1048, %v1071
    %v1101 = vadd.f32 %v1049, %v1071
    %v1102 = vadd.f32 %v1050, %v1076
    %v1103 = vadd.f32 %v1051, %v1076
    %v1104 = vadd.f32 %v1052, %v1076
    %v1105 = vadd.f32 %v1053, %v1076
    %v1106 = vadd.f32 %v1054, %v1076
    %v1107 = vadd.f32 %v1055, %v1076
    %v1108 = vadd.f32 %v1056, %v1076
    %v1109 = vadd.f32 %v1057, %v1076
    %v1110 = vmax.f32 %v1078, 0.0
    %v1111 = vmax.f32 %v1079, 0.0
    %v1112 = vmax.f32 %v1080, 0.0
    %v1113 = vmax.f32 %v1081, 0.0
    %v1114 = vmax.f32 %v1082, 0.0
    %v1115 = vmax.f32 %v1083, 0.0
    %v1116 = vmax.f32 %v1084, 0.0
    %v1117 = vmax.f32 %v1085, 0.0
    %v1118 = vmax.f32 %v1086, 0.0
    %v1119 = vmax.f32 %v1087, 0.0
    %v1120 = vmax.f32 %v1088, 0.0
    %v1121 = vmax.f32 %v1089, 0.0
    %v1122 = vmax.f32 %v1090, 0.0
    %v1123 = vmax.f32 %v1091, 0.0
    %v1124 = vmax.f32 %v1092, 0.0
    %v1125 = vmax.f32 %v1093, 0.0
    %v1126 = vmax.f32 %v1094, 0.0
    %v1127 = vmax.f32 %v1095, 0.0
    %v1128 = vmax.f32 %v1096, 0.0
    %v1129 = vmax.f32 %v1097, 0.0
    %v1130 = vmax.f32 %v1098, 0.0
    %v1131 = vmax.f32 %v1099, 0.0
    %v1132 = vmax.f32 %v1100, 0.0
    %v1133 = vmax.f32 %v1101, 0.0
    %v1134 = vmax.f32 %v1102, 0.0
    %v1135 = vmax.f32 %v1103, 0.0
    %v1136 = vmax.f32 %v1104, 0.0
    %v1137 = vmax.f32 %v1105, 0.0
    %v1138 = vmax.f32 %v1106, 0.0
    %v1139 = vmax.f32 %v1107, 0.0
    %v1140 = vmax.f32 %v1108, 0.0
    %v1141 = vmax.f32 %v1109, 0.0
    %v1142 = vld [vmem:[%s2] sm:$0xff]
    %v1143 = vld [vmem:[%s2 + $0x8] sm:$0xff]
    %v1144 = vld [vmem:[%s2 + $0x10] sm:$0xff]
    %v1145 = vld [vmem:[%s2 + $0x18] sm:$0xff]
    %1146 = vrot.lane.b32.xlu0 %v1110, 1
    %v1147 = vpop.permute.xlu0 %1146
    %1148 = vrot.lane.b32.xlu0 %v1118, 1
    %v1149 = vpop.permute.xlu0 %1148
    %1150 = vrot.lane.b32.xlu0 %v1126, 1
    %v1151 = vpop.permute.xlu0 %1150
    %1152 = vrot.lane.b32.xlu0 %v1134, 1
    %v1153 = vpop.permute.xlu0 %1152
    %1154 = vrot.lane.b32.xlu0 %v1111, 1
    %v1155 = vpop.permute.xlu0 %1154
    %1156 = vrot.lane.b32.xlu0 %v1119, 1
    %v1157 = vpop.permute.xlu0 %1156
    %1158 = vrot.lane.b32.xlu0 %v1127, 1
    %v1159 = vpop.permute.xlu0 %1158
    %1160 = vrot.lane.b32.xlu0 %v1135, 1
    %v1161 = vpop.permute.xlu0 %1160
    %1162 = vrot.lane.b32.xlu0 %v1112, 1
    %v1163 = vpop.permute.xlu0 %1162
    %1164 = vrot.lane.b32.xlu0 %v1120, 1
    %v1165 = vpop.permute.xlu0 %1164
    %1166 = vrot.lane.b32.xlu0 %v1128, 1
    %v1167 = vpop.permute.xlu0 %1166
    %1168 = vrot.lane.b32.xlu0 %v1136, 1
    %v1169 = vpop.permute.xlu0 %1168
    %1170 = vrot.lane.b32.xlu0 %v1113, 1
    %v1171 = vpop.permute.xlu0 %1170
    %1172 = vrot.lane.b32.xlu0 %v1121, 1
    %v1173 = vpop.permute.xlu0 %1172
    %1174 = vrot.lane.b32.xlu0 %v1129, 1
    %v1175 = vpop.permute.xlu0 %1174
    %1176 = vrot.lane.b32.xlu0 %v1137, 1
    %v1177 = vpop.permute.xlu0 %1176
    %1178 = vrot.lane.b32.xlu0 %v1114, 1
    %v1179 = vpop.permute.xlu0 %1178
    %1180 = vrot.lane.b32.xlu0 %v1122, 1
    %v1181 = vpop.permute.xlu0 %1180
    %1182 = vrot.lane.b32.xlu0 %v1130, 1
    %v1183 = vpop.permute.xlu0 %1182
    %1184 = vrot.lane.b32.xlu0 %v1138, 1
    %v1185 = vpop.permute.xlu0 %1184
    %1186 = vrot.lane.b32.xlu0 %v1115, 1
    %v1187 = vpop.permute.xlu0 %1186
    %1188 = vrot.lane.b32.xlu0 %v1123, 1
    %v1189 = vpop.permute.xlu0 %1188
    %1190 = vrot.lane.b32.xlu0 %v1131, 1
    %v1191 = vpop.permute.xlu0 %1190
    %1192 = vrot.lane.b32.xlu0 %v1139, 1
    %v1193 = vpop.permute.xlu0 %1192
    %1194 = vrot.lane.b32.xlu0 %v1116, 1
    %v1195 = vpop.permute.xlu0 %1194
    %1196 = vrot.lane.b32.xlu0 %v1124, 1
    %v1197 = vpop.permute.xlu0 %1196
    %1198 = vrot.lane.b32.xlu0 %v1132, 1
    %v1199 = vpop.permute.xlu0 %1198
    %1200 = vrot.lane.b32.xlu0 %v1140, 1
    %v1201 = vpop.permute.xlu0 %1200
    %1202 = vrot.lane.b32.xlu0 %v1117, 1
    %v1203 = vpop.permute.xlu0 %1202
    %1204 = vrot.lane.b32.xlu0 %v1125, 1
    %v1205 = vpop.permute.xlu0 %1204
    %1206 = vrot.lane.b32.xlu0 %v1133, 1
    %v1207 = vpop.permute.xlu0 %1206
    %1208 = vrot.lane.b32.xlu0 %v1141, 1
    %v1209 = vpop.permute.xlu0 %1208
    %v1210 = vsel %vm143, %v1195, %v1203
    %v1211 = vsel %vm143, %v1197, %v1205
    %v1212 = vsel %vm143, %v1199, %v1207
    %v1213 = vsel %vm143, %v1201, %v1209
    %v1214 = vsel %vm143, %v1187, %v1195
    %v1215 = vsel %vm143, %v1189, %v1197
    %v1216 = vsel %vm143, %v1191, %v1199
    %v1217 = vsel %vm143, %v1193, %v1201
    %v1218 = vsel %vm143, %v1179, %v1187
    %v1219 = vsel %vm143, %v1181, %v1189
    %v1220 = vsel %vm143, %v1183, %v1191
    %v1221 = vsel %vm143, %v1185, %v1193
    %v1222 = vsel %vm143, %v1171, %v1179
    %v1223 = vsel %vm143, %v1173, %v1181
    %v1224 = vsel %vm143, %v1175, %v1183
    %v1225 = vsel %vm143, %v1177, %v1185
    %v1226 = vsel %vm143, %v1163, %v1171
    %v1227 = vsel %vm143, %v1165, %v1173
    %v1228 = vsel %vm143, %v1167, %v1175
    %v1229 = vsel %vm143, %v1169, %v1177
    %v1230 = vsel %vm143, %v1155, %v1163
    %v1231 = vsel %vm143, %v1157, %v1165
    %v1232 = vsel %vm143, %v1159, %v1167
    %v1233 = vsel %vm143, %v1161, %v1169
    %v1234 = vsel %vm143, %v1147, %v1155
    %v1235 = vsel %vm143, %v1149, %v1157
    %v1236 = vsel %vm143, %v1151, %v1159
    %v1237 = vsel %vm143, %v1153, %v1161
    %v1238 = vsel %vm143, %v1203, %v1147
    %v1239 = vsel %vm143, %v1205, %v1149
    %v1240 = vsel %vm143, %v1207, %v1151
    %v1241 = vsel %vm143, %v1209, %v1153
    %v1242 = vmul.f32 %v1238, %v223
    %v1243 = vmul.f32 %v1234, %v227
    %v1244 = vmul.f32 %v1230, %v231
    %v1245 = vmul.f32 %v1226, %v235
    %v1246 = vmul.f32 %v1222, %v239
    %v1247 = vmul.f32 %v1218, %v243
    %v1248 = vmul.f32 %v1214, %v247
    %v1249 = vmul.f32 %v1210, %v251
    %v1250 = vmul.f32 %v1239, %v223
    %v1251 = vmul.f32 %v1235, %v227
    %v1252 = vmul.f32 %v1231, %v231
    %v1253 = vmul.f32 %v1227, %v235
    %v1254 = vmul.f32 %v1223, %v239
    %v1255 = vmul.f32 %v1219, %v243
    %v1256 = vmul.f32 %v1215, %v247
    %v1257 = vmul.f32 %v1211, %v251
    %v1258 = vmul.f32 %v1240, %v223
    %v1259 = vmul.f32 %v1236, %v227
    %v1260 = vmul.f32 %v1232, %v231
    %v1261 = vmul.f32 %v1228, %v235
    %v1262 = vmul.f32 %v1224, %v239
    %v1263 = vmul.f32 %v1220, %v243
    %v1264 = vmul.f32 %v1216, %v247
    %v1265 = vmul.f32 %v1212, %v251
    %v1266 = vmul.f32 %v1241, %v223
    %v1267 = vmul.f32 %v1237, %v227
    %v1268 = vmul.f32 %v1233, %v231
    %v1269 = vmul.f32 %v1229, %v235
    %v1270 = vmul.f32 %v1225, %v239
    %v1271 = vmul.f32 %v1221, %v243
    %v1272 = vmul.f32 %v1217, %v247
    %v1273 = vmul.f32 %v1213, %v251
    %1274 = vrot.lane.b32.xlu0 %v1110, 127
    %v1275 = vpop.permute.xlu0 %1274
    %1276 = vrot.lane.b32.xlu0 %v1118, 127
    %v1277 = vpop.permute.xlu0 %1276
    %1278 = vrot.lane.b32.xlu0 %v1126, 127
    %v1279 = vpop.permute.xlu0 %1278
    %1280 = vrot.lane.b32.xlu0 %v1134, 127
    %v1281 = vpop.permute.xlu0 %1280
    %1282 = vrot.lane.b32.xlu0 %v1111, 127
    %v1283 = vpop.permute.xlu0 %1282
    %1284 = vrot.lane.b32.xlu0 %v1119, 127
    %v1285 = vpop.permute.xlu0 %1284
    %1286 = vrot.lane.b32.xlu0 %v1127, 127
    %v1287 = vpop.permute.xlu0 %1286
    %1288 = vrot.lane.b32.xlu0 %v1135, 127
    %v1289 = vpop.permute.xlu0 %1288
    %1290 = vrot.lane.b32.xlu0 %v1112, 127
    %v1291 = vpop.permute.xlu0 %1290
    %1292 = vrot.lane.b32.xlu0 %v1120, 127
    %v1293 = vpop.permute.xlu0 %1292
    %1294 = vrot.lane.b32.xlu0 %v1128, 127
    %v1295 = vpop.permute.xlu0 %1294
    %1296 = vrot.lane.b32.xlu0 %v1136, 127
    %v1297 = vpop.permute.xlu0 %1296
    %1298 = vrot.lane.b32.xlu0 %v1113, 127
    %v1299 = vpop.permute.xlu0 %1298
    %1300 = vrot.lane.b32.xlu0 %v1121, 127
    %v1301 = vpop.permute.xlu0 %1300
    %1302 = vrot.lane.b32.xlu0 %v1129, 127
    %v1303 = vpop.permute.xlu0 %1302
    %1304 = vrot.lane.b32.xlu0 %v1137, 127
    %v1305 = vpop.permute.xlu0 %1304
    %1306 = vrot.lane.b32.xlu0 %v1114, 127
    %v1307 = vpop.permute.xlu0 %1306
    %1308 = vrot.lane.b32.xlu0 %v1122, 127
    %v1309 = vpop.permute.xlu0 %1308
    %1310 = vrot.lane.b32.xlu0 %v1130, 127
    %v1311 = vpop.permute.xlu0 %1310
    %1312 = vrot.lane.b32.xlu0 %v1138, 127
    %v1313 = vpop.permute.xlu0 %1312
    %1314 = vrot.lane.b32.xlu0 %v1115, 127
    %v1315 = vpop.permute.xlu0 %1314
    %1316 = vrot.lane.b32.xlu0 %v1123, 127
    %v1317 = vpop.permute.xlu0 %1316
    %1318 = vrot.lane.b32.xlu0 %v1131, 127
    %v1319 = vpop.permute.xlu0 %1318
    %1320 = vrot.lane.b32.xlu0 %v1139, 127
    %v1321 = vpop.permute.xlu0 %1320
    %1322 = vrot.lane.b32.xlu0 %v1116, 127
    %v1323 = vpop.permute.xlu0 %1322
    %1324 = vrot.lane.b32.xlu0 %v1124, 127
    %v1325 = vpop.permute.xlu0 %1324
    %1326 = vrot.lane.b32.xlu0 %v1132, 127
    %v1327 = vpop.permute.xlu0 %1326
    %1328 = vrot.lane.b32.xlu0 %v1140, 127
    %v1329 = vpop.permute.xlu0 %1328
    %1330 = vrot.lane.b32.xlu0 %v1117, 127
    %v1331 = vpop.permute.xlu0 %1330
    %1332 = vrot.lane.b32.xlu0 %v1125, 127
    %v1333 = vpop.permute.xlu0 %1332
    %1334 = vrot.lane.b32.xlu0 %v1133, 127
    %v1335 = vpop.permute.xlu0 %1334
    %1336 = vrot.lane.b32.xlu0 %v1141, 127
    %v1337 = vpop.permute.xlu0 %1336
    %v1338 = vsel %vm348, %v1323, %v1331
    %v1339 = vsel %vm348, %v1325, %v1333
    %v1340 = vsel %vm348, %v1327, %v1335
    %v1341 = vsel %vm348, %v1329, %v1337
    %v1342 = vsel %vm348, %v1315, %v1323
    %v1343 = vsel %vm348, %v1317, %v1325
    %v1344 = vsel %vm348, %v1319, %v1327
    %v1345 = vsel %vm348, %v1321, %v1329
    %v1346 = vsel %vm348, %v1307, %v1315
    %v1347 = vsel %vm348, %v1309, %v1317
    %v1348 = vsel %vm348, %v1311, %v1319
    %v1349 = vsel %vm348, %v1313, %v1321
    %v1350 = vsel %vm348, %v1299, %v1307
    %v1351 = vsel %vm348, %v1301, %v1309
    %v1352 = vsel %vm348, %v1303, %v1311
    %v1353 = vsel %vm348, %v1305, %v1313
    %v1354 = vsel %vm348, %v1291, %v1299
    %v1355 = vsel %vm348, %v1293, %v1301
    %v1356 = vsel %vm348, %v1295, %v1303
    %v1357 = vsel %vm348, %v1297, %v1305
    %v1358 = vsel %vm348, %v1283, %v1291
    %v1359 = vsel %vm348, %v1285, %v1293
    %v1360 = vsel %vm348, %v1287, %v1295
    %v1361 = vsel %vm348, %v1289, %v1297
    %v1362 = vsel %vm348, %v1275, %v1283
    %v1363 = vsel %vm348, %v1277, %v1285
    %v1364 = vsel %vm348, %v1279, %v1287
    %v1365 = vsel %vm348, %v1281, %v1289
    %v1366 = vsel %vm348, %v1331, %v1275
    %v1367 = vsel %vm348, %v1333, %v1277
    %v1368 = vsel %vm348, %v1335, %v1279
    %v1369 = vsel %vm348, %v1337, %v1281
    %v1370 = vmul.f32 %v1362, %v424
    %v1371 = vmul.f32 %v1358, %v428
    %v1372 = vmul.f32 %v1354, %v432
    %v1373 = vmul.f32 %v1350, %v436
    %v1374 = vmul.f32 %v1346, %v440
    %v1375 = vmul.f32 %v1342, %v444
    %v1376 = vmul.f32 %v1338, %v448
    %v1377 = vmul.f32 %v1366, %v452
    %v1378 = vmul.f32 %v1363, %v424
    %v1379 = vmul.f32 %v1359, %v428
    %v1380 = vmul.f32 %v1355, %v432
    %v1381 = vmul.f32 %v1351, %v436
    %v1382 = vmul.f32 %v1347, %v440
    %v1383 = vmul.f32 %v1343, %v444
    %v1384 = vmul.f32 %v1339, %v448
    %v1385 = vmul.f32 %v1367, %v452
    %v1386 = vmul.f32 %v1364, %v424
    %v1387 = vmul.f32 %v1360, %v428
    %v1388 = vmul.f32 %v1356, %v432
    %v1389 = vmul.f32 %v1352, %v436
    %v1390 = vmul.f32 %v1348, %v440
    %v1391 = vmul.f32 %v1344, %v444
    %v1392 = vmul.f32 %v1340, %v448
    %v1393 = vmul.f32 %v1368, %v452
    %v1394 = vmul.f32 %v1365, %v424
    %v1395 = vmul.f32 %v1361, %v428
    %v1396 = vmul.f32 %v1357, %v432
    %v1397 = vmul.f32 %v1353, %v436
    %v1398 = vmul.f32 %v1349, %v440
    %v1399 = vmul.f32 %v1345, %v444
    %v1400 = vmul.f32 %v1341, %v448
    %v1401 = vmul.f32 %v1369, %v452
    %v1403 = vsel %vm485, %v1142, 0
    %v1406 = vsel %vm485, %v1143, 0
    %v1409 = vsel %vm485, %v1144, 0
    %v1412 = vsel %vm485, %v1145, 0
    %1414 = vmatprep.subr.mxu0 %v1243
    %1415 = vmatpush1.msra.mxu0 %v1242
    %1416 = vmatprep.subr.mxu0 %v1251
    %1417 = vmatpush1.msra.mxu0 %v1250
    %1418 = vmatprep.subr.mxu0 %v1259
    %1419 = vmatpush1.msra.mxu0 %v1258
    %1420 = vmatprep.subr.mxu0 %v1267
    %1421 = vmatpush1.msra.mxu0 %v1266
    %1422 = vmatprep.subr.mxu0 %v1111
    %1423 = vmatpush1.msra.mxu0 %v1110
    %1424 = vmatprep.subr.mxu0 %v1119
    %1425 = vmatpush1.msra.mxu0 %v1118
    %1426 = vmatprep.subr.mxu0 %v1127
    %1427 = vmatpush1.msra.mxu0 %v1126
    %1428 = vmatprep.subr.mxu0 %v1135
    %1429 = vmatpush1.msra.mxu0 %v1134
    %1430 = vmatprep.subr.mxu0 %v1371
    %1431 = vmatpush1.msra.mxu0 %v1370
    %1432 = vmatprep.subr.mxu0 %v1379
    %1433 = vmatpush1.msra.mxu0 %v1378
    %1434 = vmatprep.subr.mxu0 %v1387
    %1435 = vmatpush1.msra.mxu0 %v1386
    %1436 = vmatprep.subr.mxu0 %v1395
    %1437 = vmatpush1.msra.mxu0 %v1394
    %1438 = vmatprep.subr.mxu0 0.0
    %1439 = vmatpush1.msra.mxu0 0.0
    %1440 = vmatprep.subr.mxu0 0.0
    %1441 = vmatpush1.msra.mxu0 0.0
    %1442 = vmatprep.subr.mxu0 0.0
    %1443 = vmatpush1.msra.mxu0 0.0
    %1444 = vmatprep.subr.mxu0 0.0
    %1445 = vmatpush1.msra.mxu0 0.0
    %1446 = vmatprep.subr.mxu0 0.0
    %1447 = vmatpush1.msra.mxu0 0.0
    %1448 = vmatprep.subr.mxu0 0.0
    %1449 = vmatpush1.msra.mxu0 0.0
    %1450 = vmatprep.subr.mxu0 0.0
    %1451 = vmatpush1.msra.mxu0 0.0
    %1452 = vmatprep.subr.mxu0 0.0
    %1453 = vmatpush1.msra.mxu0 0.0
    %1454 = vmatprep.subr.mxu0 0.0
    %1455 = vmatpush1.msra.mxu0 0.0
    %1456 = vmatprep.subr.mxu0 0.0
    %1457 = vmatpush1.msra.mxu0 0.0
    %1458 = vmatprep.subr.mxu0 0.0
    %1459 = vmatpush1.msra.mxu0 0.0
    %1460 = vmatprep.subr.mxu0 0.0
    %1461 = vmatpush1.msra.mxu0 0.0
    %1462 = vmatprep.subr.mxu0 0.0
    %1463 = vmatpush1.msra.mxu0 0.0
    %1464 = vmatprep.subr.mxu0 0.0
    %1465 = vmatpush1.msra.mxu0 0.0
    %1466 = vmatprep.subr.mxu0 0.0
    %1467 = vmatpush1.msra.mxu0 0.0
    %1468 = vmatprep.subr.mxu0 0.0
    %1469 = vmatpush1.msra.mxu0 0.0
    %1470 = vmatprep.subr.mxu0 0.0
    %1471 = vmatpush1.msra.mxu0 0.0
    %1472 = vmatprep.subr.mxu0 0.0
    %1473 = vmatpush1.msra.mxu0 0.0
    %1474 = vmatprep.subr.mxu0 0.0
    %1475 = vmatpush1.msra.mxu0 0.0
    %1476 = vmatprep.subr.mxu0 0.0
    %1477 = vmatpush1.msra.mxu0 0.0
    %1478 = vmatprep.mubr.f32.mxu0 0.0
    %1479 = vmatmul.mubr.f32.gmra.mrb[0].mxu0 %v1403
    %v1480 = vpop.f32.mrb[0].mxu0
    %v1481 = vadd.f32 0.0, %v1480
    %v1482 = vpop.f32.mrb[0].mxu0
    %v1483 = vadd.f32 0.0, %v1482
    %1484 = vmatprep.mubr.f32.mxu0 0.0
    %1485 = vmatmul.mubr.f32.gmra.mrb[0].mxu0 %v1406
    %v1486 = vpop.f32.mrb[0].mxu0
    %v1487 = vadd.f32 0.0, %v1486
    %v1488 = vpop.f32.mrb[0].mxu0
    %v1489 = vadd.f32 0.0, %v1488
    %1490 = vmatprep.mubr.f32.mxu0 0.0
    %1491 = vmatmul.mubr.f32.gmra.mrb[0].mxu0 %v1409
    %v1492 = vpop.f32.mrb[0].mxu0
    %v1493 = vadd.f32 0.0, %v1492
    %v1494 = vpop.f32.mrb[0].mxu0
    %v1495 = vadd.f32 0.0, %v1494
    %1496 = vmatprep.mubr.f32.mxu0 0.0
    %1497 = vmatmul.mubr.f32.gmra.mrb[0].mxu0 %v1412
    %v1498 = vpop.f32.mrb[0].mxu0
    %v1499 = vadd.f32 0.0, %v1498
    %v1500 = vpop.f32.mrb[0].mxu0
    %v1501 = vadd.f32 0.0, %v1500
    %1502 = vdwg.mxu0
    %1503 = vmatprep.subr.mxu0 %v1245
    %1504 = vmatpush1.msra.mxu0 %v1244
    %1505 = vmatprep.subr.mxu0 %v1253
    %1506 = vmatpush1.msra.mxu0 %v1252
    %1507 = vmatprep.subr.mxu0 %v1261
    %1508 = vmatpush1.msra.mxu0 %v1260
    %1509 = vmatprep.subr.mxu0 %v1269
    %1510 = vmatpush1.msra.mxu0 %v1268
    %1511 = vmatprep.subr.mxu0 %v1113
    %1512 = vmatpush1.msra.mxu0 %v1112
    %1513 = vmatprep.subr.mxu0 %v1121
    %1514 = vmatpush1.msra.mxu0 %v1120
    %1515 = vmatprep.subr.mxu0 %v1129
    %1516 = vmatpush1.msra.mxu0 %v1128
    %1517 = vmatprep.subr.mxu0 %v1137
    %1518 = vmatpush1.msra.mxu0 %v1136
    %1519 = vmatprep.subr.mxu0 %v1373
    %1520 = vmatpush1.msra.mxu0 %v1372
    %1521 = vmatprep.subr.mxu0 %v1381
    %1522 = vmatpush1.msra.mxu0 %v1380
    %1523 = vmatprep.subr.mxu0 %v1389
    %1524 = vmatpush1.msra.mxu0 %v1388
    %1525 = vmatprep.subr.mxu0 %v1397
    %1526 = vmatpush1.msra.mxu0 %v1396
    %1527 = vmatprep.subr.mxu0 0.0
    %1528 = vmatpush1.msra.mxu0 0.0
    %1529 = vmatprep.subr.mxu0 0.0
    %1530 = vmatpush1.msra.mxu0 0.0
    %1531 = vmatprep.subr.mxu0 0.0
    %1532 = vmatpush1.msra.mxu0 0.0
    %1533 = vmatprep.subr.mxu0 0.0
    %1534 = vmatpush1.msra.mxu0 0.0
    %1535 = vmatprep.subr.mxu0 0.0
    %1536 = vmatpush1.msra.mxu0 0.0
    %1537 = vmatprep.subr.mxu0 0.0
    %1538 = vmatpush1.msra.mxu0 0.0
    %1539 = vmatprep.subr.mxu0 0.0
    %1540 = vmatpush1.msra.mxu0 0.0
    %1541 = vmatprep.subr.mxu0 0.0
    %1542 = vmatpush1.msra.mxu0 0.0
    %1543 = vmatprep.subr.mxu0 0.0
    %1544 = vmatpush1.msra.mxu0 0.0
    %1545 = vmatprep.subr.mxu0 0.0
    %1546 = vmatpush1.msra.mxu0 0.0
    %1547 = vmatprep.subr.mxu0 0.0
    %1548 = vmatpush1.msra.mxu0 0.0
    %1549 = vmatprep.subr.mxu0 0.0
    %1550 = vmatpush1.msra.mxu0 0.0
    %1551 = vmatprep.subr.mxu0 0.0
    %1552 = vmatpush1.msra.mxu0 0.0
    %1553 = vmatprep.subr.mxu0 0.0
    %1554 = vmatpush1.msra.mxu0 0.0
    %1555 = vmatprep.subr.mxu0 0.0
    %1556 = vmatpush1.msra.mxu0 0.0
    %1557 = vmatprep.subr.mxu0 0.0
    %1558 = vmatpush1.msra.mxu0 0.0
    %1559 = vmatprep.subr.mxu0 0.0
    %1560 = vmatpush1.msra.mxu0 0.0
    %1561 = vmatprep.subr.mxu0 0.0
    %1562 = vmatpush1.msra.mxu0 0.0
    %1563 = vmatprep.subr.mxu0 0.0
    %1564 = vmatpush1.msra.mxu0 0.0
    %1565 = vmatprep.subr.mxu0 0.0
    %1566 = vmatpush1.msra.mxu0 0.0
    %1567 = vmatprep.mubr.f32.mxu0 0.0
    %1568 = vmatmul.mubr.f32.gmra.mrb[0].mxu0 %v1403
    %v1569 = vpop.f32.mrb[0].mxu0
    %v1570 = vadd.f32 0.0, %v1569
    %v1571 = vpop.f32.mrb[0].mxu0
    %v1572 = vadd.f32 0.0, %v1571
    %1573 = vmatprep.mubr.f32.mxu0 0.0
    %1574 = vmatmul.mubr.f32.gmra.mrb[0].mxu0 %v1406
    %v1575 = vpop.f32.mrb[0].mxu0
    %v1576 = vadd.f32 0.0, %v1575
    %v1577 = vpop.f32.mrb[0].mxu0
    %v1578 = vadd.f32 0.0, %v1577
    %1579 = vmatprep.mubr.f32.mxu0 0.0
    %1580 = vmatmul.mubr.f32.gmra.mrb[0].mxu0 %v1409
    %v1581 = vpop.f32.mrb[0].mxu0
    %v1582 = vadd.f32 0.0, %v1581
    %v1583 = vpop.f32.mrb[0].mxu0
    %v1584 = vadd.f32 0.0, %v1583
    %1585 = vmatprep.mubr.f32.mxu0 0.0
    %1586 = vmatmul.mubr.f32.gmra.mrb[0].mxu0 %v1412
    %v1587 = vpop.f32.mrb[0].mxu0
    %v1588 = vadd.f32 0.0, %v1587
    %v1589 = vpop.f32.mrb[0].mxu0
    %v1590 = vadd.f32 0.0, %v1589
    %1591 = vdwg.mxu0
    %1592 = vmatprep.subr.mxu0 %v1247
    %1593 = vmatpush1.msra.mxu0 %v1246
    %1594 = vmatprep.subr.mxu0 %v1255
    %1595 = vmatpush1.msra.mxu0 %v1254
    %1596 = vmatprep.subr.mxu0 %v1263
    %1597 = vmatpush1.msra.mxu0 %v1262
    %1598 = vmatprep.subr.mxu0 %v1271
    %1599 = vmatpush1.msra.mxu0 %v1270
    %1600 = vmatprep.subr.mxu0 %v1115
    %1601 = vmatpush1.msra.mxu0 %v1114
    %1602 = vmatprep.subr.mxu0 %v1123
    %1603 = vmatpush1.msra.mxu0 %v1122
    %1604 = vmatprep.subr.mxu0 %v1131
    %1605 = vmatpush1.msra.mxu0 %v1130
    %1606 = vmatprep.subr.mxu0 %v1139
    %1607 = vmatpush1.msra.mxu0 %v1138
    %1608 = vmatprep.subr.mxu0 %v1375
    %1609 = vmatpush1.msra.mxu0 %v1374
    %1610 = vmatprep.subr.mxu0 %v1383
    %1611 = vmatpush1.msra.mxu0 %v1382
    %1612 = vmatprep.subr.mxu0 %v1391
    %1613 = vmatpush1.msra.mxu0 %v1390
    %1614 = vmatprep.subr.mxu0 %v1399
    %1615 = vmatpush1.msra.mxu0 %v1398
    %1616 = vmatprep.subr.mxu0 0.0
    %1617 = vmatpush1.msra.mxu0 0.0
    %1618 = vmatprep.subr.mxu0 0.0
    %1619 = vmatpush1.msra.mxu0 0.0
    %1620 = vmatprep.subr.mxu0 0.0
    %1621 = vmatpush1.msra.mxu0 0.0
    %1622 = vmatprep.subr.mxu0 0.0
    %1623 = vmatpush1.msra.mxu0 0.0
    %1624 = vmatprep.subr.mxu0 0.0
    %1625 = vmatpush1.msra.mxu0 0.0
    %1626 = vmatprep.subr.mxu0 0.0
    %1627 = vmatpush1.msra.mxu0 0.0
    %1628 = vmatprep.subr.mxu0 0.0
    %1629 = vmatpush1.msra.mxu0 0.0
    %1630 = vmatprep.subr.mxu0 0.0
    %1631 = vmatpush1.msra.mxu0 0.0
    %1632 = vmatprep.subr.mxu0 0.0
    %1633 = vmatpush1.msra.mxu0 0.0
    %1634 = vmatprep.subr.mxu0 0.0
    %1635 = vmatpush1.msra.mxu0 0.0
    %1636 = vmatprep.subr.mxu0 0.0
    %1637 = vmatpush1.msra.mxu0 0.0
    %1638 = vmatprep.subr.mxu0 0.0
    %1639 = vmatpush1.msra.mxu0 0.0
    %1640 = vmatprep.subr.mxu0 0.0
    %1641 = vmatpush1.msra.mxu0 0.0
    %1642 = vmatprep.subr.mxu0 0.0
    %1643 = vmatpush1.msra.mxu0 0.0
    %1644 = vmatprep.subr.mxu0 0.0
    %1645 = vmatpush1.msra.mxu0 0.0
    %1646 = vmatprep.subr.mxu0 0.0
    %1647 = vmatpush1.msra.mxu0 0.0
    %1648 = vmatprep.subr.mxu0 0.0
    %1649 = vmatpush1.msra.mxu0 0.0
    %1650 = vmatprep.subr.mxu0 0.0
    %1651 = vmatpush1.msra.mxu0 0.0
    %1652 = vmatprep.subr.mxu0 0.0
    %1653 = vmatpush1.msra.mxu0 0.0
    %1654 = vmatprep.subr.mxu0 0.0
    %1655 = vmatpush1.msra.mxu0 0.0
    %1656 = vmatprep.mubr.f32.mxu0 0.0
    %1657 = vmatmul.mubr.f32.gmra.mrb[0].mxu0 %v1403
    %v1658 = vpop.f32.mrb[0].mxu0
    %v1659 = vadd.f32 0.0, %v1658
    %v1660 = vpop.f32.mrb[0].mxu0
    %v1661 = vadd.f32 0.0, %v1660
    %1662 = vmatprep.mubr.f32.mxu0 0.0
    %1663 = vmatmul.mubr.f32.gmra.mrb[0].mxu0 %v1406
    %v1664 = vpop.f32.mrb[0].mxu0
    %v1665 = vadd.f32 0.0, %v1664
    %v1666 = vpop.f32.mrb[0].mxu0
    %v1667 = vadd.f32 0.0, %v1666
    %1668 = vmatprep.mubr.f32.mxu0 0.0
    %1669 = vmatmul.mubr.f32.gmra.mrb[0].mxu0 %v1409
    %v1670 = vpop.f32.mrb[0].mxu0
    %v1671 = vadd.f32 0.0, %v1670
    %v1672 = vpop.f32.mrb[0].mxu0
    %v1673 = vadd.f32 0.0, %v1672
    %1674 = vmatprep.mubr.f32.mxu0 0.0
    %1675 = vmatmul.mubr.f32.gmra.mrb[0].mxu0 %v1412
    %v1676 = vpop.f32.mrb[0].mxu0
    %v1677 = vadd.f32 0.0, %v1676
    %v1678 = vpop.f32.mrb[0].mxu0
    %v1679 = vadd.f32 0.0, %v1678
    %1680 = vdwg.mxu0
    %1681 = vmatprep.subr.mxu0 %v1249
    %1682 = vmatpush1.msra.mxu0 %v1248
    %1683 = vmatprep.subr.mxu0 %v1257
    %1684 = vmatpush1.msra.mxu0 %v1256
    %1685 = vmatprep.subr.mxu0 %v1265
    %1686 = vmatpush1.msra.mxu0 %v1264
    %1687 = vmatprep.subr.mxu0 %v1273
    %1688 = vmatpush1.msra.mxu0 %v1272
    %1689 = vmatprep.subr.mxu0 %v1117
    %1690 = vmatpush1.msra.mxu0 %v1116
    %1691 = vmatprep.subr.mxu0 %v1125
    %1692 = vmatpush1.msra.mxu0 %v1124
    %1693 = vmatprep.subr.mxu0 %v1133
    %1694 = vmatpush1.msra.mxu0 %v1132
    %1695 = vmatprep.subr.mxu0 %v1141
    %1696 = vmatpush1.msra.mxu0 %v1140
    %1697 = vmatprep.subr.mxu0 %v1377
    %1698 = vmatpush1.msra.mxu0 %v1376
    %1699 = vmatprep.subr.mxu0 %v1385
    %1700 = vmatpush1.msra.mxu0 %v1384
    %1701 = vmatprep.subr.mxu0 %v1393
    %1702 = vmatpush1.msra.mxu0 %v1392
    %1703 = vmatprep.subr.mxu0 %v1401
    %1704 = vmatpush1.msra.mxu0 %v1400
    %1705 = vmatprep.subr.mxu0 0.0
    %1706 = vmatpush1.msra.mxu0 0.0
    %1707 = vmatprep.subr.mxu0 0.0
    %1708 = vmatpush1.msra.mxu0 0.0
    %1709 = vmatprep.subr.mxu0 0.0
    %1710 = vmatpush1.msra.mxu0 0.0
    %1711 = vmatprep.subr.mxu0 0.0
    %1712 = vmatpush1.msra.mxu0 0.0
    %1713 = vmatprep.subr.mxu0 0.0
    %1714 = vmatpush1.msra.mxu0 0.0
    %1715 = vmatprep.subr.mxu0 0.0
    %1716 = vmatpush1.msra.mxu0 0.0
    %1717 = vmatprep.subr.mxu0 0.0
    %1718 = vmatpush1.msra.mxu0 0.0
    %1719 = vmatprep.subr.mxu0 0.0
    %1720 = vmatpush1.msra.mxu0 0.0
    %1721 = vmatprep.subr.mxu0 0.0
    %1722 = vmatpush1.msra.mxu0 0.0
    %1723 = vmatprep.subr.mxu0 0.0
    %1724 = vmatpush1.msra.mxu0 0.0
    %1725 = vmatprep.subr.mxu0 0.0
    %1726 = vmatpush1.msra.mxu0 0.0
    %1727 = vmatprep.subr.mxu0 0.0
    %1728 = vmatpush1.msra.mxu0 0.0
    %1729 = vmatprep.subr.mxu0 0.0
    %1730 = vmatpush1.msra.mxu0 0.0
    %1731 = vmatprep.subr.mxu0 0.0
    %1732 = vmatpush1.msra.mxu0 0.0
    %1733 = vmatprep.subr.mxu0 0.0
    %1734 = vmatpush1.msra.mxu0 0.0
    %1735 = vmatprep.subr.mxu0 0.0
    %1736 = vmatpush1.msra.mxu0 0.0
    %1737 = vmatprep.subr.mxu0 0.0
    %1738 = vmatpush1.msra.mxu0 0.0
    %1739 = vmatprep.subr.mxu0 0.0
    %1740 = vmatpush1.msra.mxu0 0.0
    %1741 = vmatprep.subr.mxu0 0.0
    %1742 = vmatpush1.msra.mxu0 0.0
    %1743 = vmatprep.subr.mxu0 0.0
    %1744 = vmatpush1.msra.mxu0 0.0
    %1745 = vmatprep.mubr.f32.mxu0 0.0
    %1746 = vmatmul.mubr.f32.gmra.mrb[0].mxu0 %v1403
    %v1747 = vpop.f32.mrb[0].mxu0
    %v1748 = vadd.f32 0.0, %v1747
    %v1749 = vpop.f32.mrb[0].mxu0
    %v1750 = vadd.f32 0.0, %v1749
    %1751 = vmatprep.mubr.f32.mxu0 0.0
    %1752 = vmatmul.mubr.f32.gmra.mrb[0].mxu0 %v1406
    %v1753 = vpop.f32.mrb[0].mxu0
    %v1754 = vadd.f32 0.0, %v1753
    %v1755 = vpop.f32.mrb[0].mxu0
    %v1756 = vadd.f32 0.0, %v1755
    %1757 = vmatprep.mubr.f32.mxu0 0.0
    %1758 = vmatmul.mubr.f32.gmra.mrb[0].mxu0 %v1409
    %v1759 = vpop.f32.mrb[0].mxu0
    %v1760 = vadd.f32 0.0, %v1759
    %v1761 = vpop.f32.mrb[0].mxu0
    %v1762 = vadd.f32 0.0, %v1761
    %1763 = vmatprep.mubr.f32.mxu0 0.0
    %1764 = vmatmul.mubr.f32.gmra.mrb[0].mxu0 %v1412
    %v1765 = vpop.f32.mrb[0].mxu0
    %v1766 = vadd.f32 0.0, %v1765
    %v1767 = vpop.f32.mrb[0].mxu0
    %v1768 = vadd.f32 0.0, %v1767
    %1769 = vdwg.mxu0
    %v1770 = vadd.f32 %v1481, %v1483
    %v1771 = vadd.f32 %v1770, %v1570
    %v1772 = vadd.f32 %v1771, %v1572
    %v1773 = vadd.f32 %v1772, %v1659
    %v1774 = vadd.f32 %v1773, %v1661
    %v1775 = vadd.f32 %v1774, %v1748
    %v1776 = vadd.f32 %v1775, %v1750
    %1777 = vadd.xlane.f32.xlu0 %v1776
    %v1778 = vpop.xlane.xlu0 %1777
    %v1779 = vadd.f32 %v1487, %v1489
    %v1780 = vadd.f32 %v1779, %v1576
    %v1781 = vadd.f32 %v1780, %v1578
    %v1782 = vadd.f32 %v1781, %v1665
    %v1783 = vadd.f32 %v1782, %v1667
    %v1784 = vadd.f32 %v1783, %v1754
    %v1785 = vadd.f32 %v1784, %v1756
    %1786 = vadd.xlane.f32.xlu0 %v1785
    %v1787 = vpop.xlane.xlu0 %1786
    %v1788 = vadd.f32 %v1493, %v1495
    %v1789 = vadd.f32 %v1788, %v1582
    %v1790 = vadd.f32 %v1789, %v1584
    %v1791 = vadd.f32 %v1790, %v1671
    %v1792 = vadd.f32 %v1791, %v1673
    %v1793 = vadd.f32 %v1792, %v1760
    %v1794 = vadd.f32 %v1793, %v1762
    %1795 = vadd.xlane.f32.xlu0 %v1794
    %v1796 = vpop.xlane.xlu0 %1795
    %v1797 = vadd.f32 %v1499, %v1501
    %v1798 = vadd.f32 %v1797, %v1588
    %v1799 = vadd.f32 %v1798, %v1590
    %v1800 = vadd.f32 %v1799, %v1677
    %v1801 = vadd.f32 %v1800, %v1679
    %v1802 = vadd.f32 %v1801, %v1766
    %v1803 = vadd.f32 %v1802, %v1768
    %1804 = vadd.xlane.f32.xlu0 %v1803
    %v1805 = vpop.xlane.xlu0 %1804
    %v1806 = vmul.f32 %v1481, %v1481
    %v1807 = vmul.f32 %v1483, %v1483
    %v1808 = vmul.f32 %v1570, %v1570
    %v1809 = vmul.f32 %v1572, %v1572
    %v1810 = vmul.f32 %v1659, %v1659
    %v1811 = vmul.f32 %v1661, %v1661
    %v1812 = vmul.f32 %v1748, %v1748
    %v1813 = vmul.f32 %v1750, %v1750
    %v1814 = vmul.f32 %v1487, %v1487
    %v1815 = vmul.f32 %v1489, %v1489
    %v1816 = vmul.f32 %v1576, %v1576
    %v1817 = vmul.f32 %v1578, %v1578
    %v1818 = vmul.f32 %v1665, %v1665
    %v1819 = vmul.f32 %v1667, %v1667
    %v1820 = vmul.f32 %v1754, %v1754
    %v1821 = vmul.f32 %v1756, %v1756
    %v1822 = vmul.f32 %v1493, %v1493
    %v1823 = vmul.f32 %v1495, %v1495
    %v1824 = vmul.f32 %v1582, %v1582
    %v1825 = vmul.f32 %v1584, %v1584
    %v1826 = vmul.f32 %v1671, %v1671
    %v1827 = vmul.f32 %v1673, %v1673
    %v1828 = vmul.f32 %v1760, %v1760
    %v1829 = vmul.f32 %v1762, %v1762
    %v1830 = vmul.f32 %v1499, %v1499
    %v1831 = vmul.f32 %v1501, %v1501
    %v1832 = vmul.f32 %v1588, %v1588
    %v1833 = vmul.f32 %v1590, %v1590
    %v1834 = vmul.f32 %v1677, %v1677
    %v1835 = vmul.f32 %v1679, %v1679
    %v1836 = vmul.f32 %v1766, %v1766
    %v1837 = vmul.f32 %v1768, %v1768
    %v1838 = vadd.f32 %v1806, %v1807
    %v1839 = vadd.f32 %v1838, %v1808
    %v1840 = vadd.f32 %v1839, %v1809
    %v1841 = vadd.f32 %v1840, %v1810
    %v1842 = vadd.f32 %v1841, %v1811
    %v1843 = vadd.f32 %v1842, %v1812
    %v1844 = vadd.f32 %v1843, %v1813
    %1845 = vadd.xlane.f32.xlu0 %v1844
    %v1846 = vpop.xlane.xlu0 %1845
    %v1847 = vadd.f32 %v1814, %v1815
    %v1848 = vadd.f32 %v1847, %v1816
    %v1849 = vadd.f32 %v1848, %v1817
    %v1850 = vadd.f32 %v1849, %v1818
    %v1851 = vadd.f32 %v1850, %v1819
    %v1852 = vadd.f32 %v1851, %v1820
    %v1853 = vadd.f32 %v1852, %v1821
    %1854 = vadd.xlane.f32.xlu0 %v1853
    %v1855 = vpop.xlane.xlu0 %1854
    %v1856 = vadd.f32 %v1822, %v1823
    %v1857 = vadd.f32 %v1856, %v1824
    %v1858 = vadd.f32 %v1857, %v1825
    %v1859 = vadd.f32 %v1858, %v1826
    %v1860 = vadd.f32 %v1859, %v1827
    %v1861 = vadd.f32 %v1860, %v1828
    %v1862 = vadd.f32 %v1861, %v1829
    %1863 = vadd.xlane.f32.xlu0 %v1862
    %v1864 = vpop.xlane.xlu0 %1863
    %v1865 = vadd.f32 %v1830, %v1831
    %v1866 = vadd.f32 %v1865, %v1832
    %v1867 = vadd.f32 %v1866, %v1833
    %v1868 = vadd.f32 %v1867, %v1834
    %v1869 = vadd.f32 %v1868, %v1835
    %v1870 = vadd.f32 %v1869, %v1836
    %v1871 = vadd.f32 %v1870, %v1837
    %1872 = vadd.xlane.f32.xlu0 %v1871
    %v1873 = vpop.xlane.xlu0 %1872
    %v1874 = vld [vmem:[%s5] sm:$0xff]
    %v1875 = vld [vmem:[%s5 + $0x8] sm:$0xff]
    %v1876 = vld [vmem:[%s5 + $0x10] sm:$0xff]
    %v1877 = vld [vmem:[%s5 + $0x18] sm:$0xff]
    %v1878 = vld [vmem:[%s6] sm:$0xff]
    %v1879 = vld [vmem:[%s6 + $0x8] sm:$0xff]
    %v1880 = vld [vmem:[%s6 + $0x10] sm:$0xff]
    %v1881 = vld [vmem:[%s6 + $0x18] sm:$0xff]
    %v1882 = vmul.f32 %v1778, 0.0009765625
    %v1883 = vmul.f32 %v1787, 0.0009765625
    %v1884 = vmul.f32 %v1796, 0.0009765625
    %v1885 = vmul.f32 %v1805, 0.0009765625
    %v1886 = vmul.f32 %v1846, 0.0009765625
    %v1887 = vmul.f32 %v1855, 0.0009765625
    %v1888 = vmul.f32 %v1864, 0.0009765625
    %v1889 = vmul.f32 %v1873, 0.0009765625
    %v1890 = vmul.f32 %v1882, %v1882
    %v1891 = vmul.f32 %v1883, %v1883
    %v1892 = vmul.f32 %v1884, %v1884
    %v1893 = vmul.f32 %v1885, %v1885
    %v1894 = vsub.f32 %v1886, %v1890
    %v1895 = vsub.f32 %v1887, %v1891
    %v1896 = vsub.f32 %v1888, %v1892
    %v1897 = vsub.f32 %v1889, %v1893
    %v1898 = vmax.f32 %v1894, 0.0
    %v1899 = vmax.f32 %v1895, 0.0
    %v1900 = vmax.f32 %v1896, 0.0
    %v1901 = vmax.f32 %v1897, 0.0
    %v1902 = vadd.f32 %v1898, 1e-05
    %v1903 = vadd.f32 %v1899, 1e-05
    %v1904 = vadd.f32 %v1900, 1e-05
    %v1905 = vadd.f32 %v1901, 1e-05
    %v1906 = vrsqrt.pop %v1902
    %v1907 = vrsqrt.pop %v1903
    %v1908 = vrsqrt.pop %v1904
    %v1909 = vrsqrt.pop %v1905
    %v1910 = vmul.f32 %v1874, %v1906
    %v1911 = vmul.f32 %v1875, %v1907
    %v1912 = vmul.f32 %v1876, %v1908
    %v1913 = vmul.f32 %v1877, %v1909
    %v1914 = vmul.f32 %v1882, %v1910
    %v1915 = vmul.f32 %v1883, %v1911
    %v1916 = vmul.f32 %v1884, %v1912
    %v1917 = vmul.f32 %v1885, %v1913
    %v1918 = vsub.f32 %v1878, %v1914
    %v1919 = vsub.f32 %v1879, %v1915
    %v1920 = vsub.f32 %v1880, %v1916
    %v1921 = vsub.f32 %v1881, %v1917
    %1923 = vset.pattern.permute.xlu0 0
    %1924 = vperm.xlu0 %1923, %v1910
    %v1925 = vpop.permute.xlu0 %1924
    %1928 = vset.pattern.permute.xlu0 0
    %1929 = vperm.xlu0 %1928, %v1911
    %v1930 = vpop.permute.xlu0 %1929
    %1933 = vset.pattern.permute.xlu0 0
    %1934 = vperm.xlu0 %1933, %v1912
    %v1935 = vpop.permute.xlu0 %1934
    %1938 = vset.pattern.permute.xlu0 0
    %1939 = vperm.xlu0 %1938, %v1913
    %v1940 = vpop.permute.xlu0 %1939
    %v1942 = vmul.f32 %v1481, %v1925
    %v1943 = vmul.f32 %v1483, %v1925
    %v1944 = vmul.f32 %v1570, %v1925
    %v1945 = vmul.f32 %v1572, %v1925
    %v1946 = vmul.f32 %v1659, %v1925
    %v1947 = vmul.f32 %v1661, %v1925
    %v1948 = vmul.f32 %v1748, %v1925
    %v1949 = vmul.f32 %v1750, %v1925
    %v1950 = vmul.f32 %v1487, %v1930
    %v1951 = vmul.f32 %v1489, %v1930
    %v1952 = vmul.f32 %v1576, %v1930
    %v1953 = vmul.f32 %v1578, %v1930
    %v1954 = vmul.f32 %v1665, %v1930
    %v1955 = vmul.f32 %v1667, %v1930
    %v1956 = vmul.f32 %v1754, %v1930
    %v1957 = vmul.f32 %v1756, %v1930
    %v1958 = vmul.f32 %v1493, %v1935
    %v1959 = vmul.f32 %v1495, %v1935
    %v1960 = vmul.f32 %v1582, %v1935
    %v1961 = vmul.f32 %v1584, %v1935
    %v1962 = vmul.f32 %v1671, %v1935
    %v1963 = vmul.f32 %v1673, %v1935
    %v1964 = vmul.f32 %v1760, %v1935
    %v1965 = vmul.f32 %v1762, %v1935
    %v1966 = vmul.f32 %v1499, %v1940
    %v1967 = vmul.f32 %v1501, %v1940
    %v1968 = vmul.f32 %v1588, %v1940
    %v1969 = vmul.f32 %v1590, %v1940
    %v1970 = vmul.f32 %v1677, %v1940
    %v1971 = vmul.f32 %v1679, %v1940
    %v1972 = vmul.f32 %v1766, %v1940
    %v1973 = vmul.f32 %v1768, %v1940
    %1975 = vset.pattern.permute.xlu0 0
    %1976 = vperm.xlu0 %1975, %v1918
    %v1977 = vpop.permute.xlu0 %1976
    %1980 = vset.pattern.permute.xlu0 0
    %1981 = vperm.xlu0 %1980, %v1919
    %v1982 = vpop.permute.xlu0 %1981
    %1985 = vset.pattern.permute.xlu0 0
    %1986 = vperm.xlu0 %1985, %v1920
    %v1987 = vpop.permute.xlu0 %1986
    %1990 = vset.pattern.permute.xlu0 0
    %1991 = vperm.xlu0 %1990, %v1921
    %v1992 = vpop.permute.xlu0 %1991
    %v1994 = vadd.f32 %v1942, %v1977
    %v1995 = vadd.f32 %v1943, %v1977
    %v1996 = vadd.f32 %v1944, %v1977
    %v1997 = vadd.f32 %v1945, %v1977
    %v1998 = vadd.f32 %v1946, %v1977
    %v1999 = vadd.f32 %v1947, %v1977
    %v2000 = vadd.f32 %v1948, %v1977
    %v2001 = vadd.f32 %v1949, %v1977
    %v2002 = vadd.f32 %v1950, %v1982
    %v2003 = vadd.f32 %v1951, %v1982
    %v2004 = vadd.f32 %v1952, %v1982
    %v2005 = vadd.f32 %v1953, %v1982
    %v2006 = vadd.f32 %v1954, %v1982
    %v2007 = vadd.f32 %v1955, %v1982
    %v2008 = vadd.f32 %v1956, %v1982
    %v2009 = vadd.f32 %v1957, %v1982
    %v2010 = vadd.f32 %v1958, %v1987
    %v2011 = vadd.f32 %v1959, %v1987
    %v2012 = vadd.f32 %v1960, %v1987
    %v2013 = vadd.f32 %v1961, %v1987
    %v2014 = vadd.f32 %v1962, %v1987
    %v2015 = vadd.f32 %v1963, %v1987
    %v2016 = vadd.f32 %v1964, %v1987
    %v2017 = vadd.f32 %v1965, %v1987
    %v2018 = vadd.f32 %v1966, %v1992
    %v2019 = vadd.f32 %v1967, %v1992
    %v2020 = vadd.f32 %v1968, %v1992
    %v2021 = vadd.f32 %v1969, %v1992
    %v2022 = vadd.f32 %v1970, %v1992
    %v2023 = vadd.f32 %v1971, %v1992
    %v2024 = vadd.f32 %v1972, %v1992
    %v2025 = vadd.f32 %v1973, %v1992
    %v2026 = vadd.f32 %v1994, %v30
    %v2027 = vadd.f32 %v1995, %v35
    %v2028 = vadd.f32 %v1996, %v40
    %v2029 = vadd.f32 %v1997, %v45
    %v2030 = vadd.f32 %v1998, %v50
    %v2031 = vadd.f32 %v1999, %v55
    %v2032 = vadd.f32 %v2000, %v60
    %v2033 = vadd.f32 %v2001, %v65
    %v2034 = vadd.f32 %v2002, %v31
    %v2035 = vadd.f32 %v2003, %v36
    %v2036 = vadd.f32 %v2004, %v41
    %v2037 = vadd.f32 %v2005, %v46
    %v2038 = vadd.f32 %v2006, %v51
    %v2039 = vadd.f32 %v2007, %v56
    %v2040 = vadd.f32 %v2008, %v61
    %v2041 = vadd.f32 %v2009, %v66
    %v2042 = vadd.f32 %v2010, %v32
    %v2043 = vadd.f32 %v2011, %v37
    %v2044 = vadd.f32 %v2012, %v42
    %v2045 = vadd.f32 %v2013, %v47
    %v2046 = vadd.f32 %v2014, %v52
    %v2047 = vadd.f32 %v2015, %v57
    %v2048 = vadd.f32 %v2016, %v62
    %v2049 = vadd.f32 %v2017, %v67
    %v2050 = vadd.f32 %v2018, %v33
    %v2051 = vadd.f32 %v2019, %v38
    %v2052 = vadd.f32 %v2020, %v43
    %v2053 = vadd.f32 %v2021, %v48
    %v2054 = vadd.f32 %v2022, %v53
    %v2055 = vadd.f32 %v2023, %v58
    %v2056 = vadd.f32 %v2024, %v63
    %v2057 = vadd.f32 %v2025, %v68
    %v2058 = vmax.f32 %v2026, 0.0
    %v2059 = vmax.f32 %v2027, 0.0
    %v2060 = vmax.f32 %v2028, 0.0
    %v2061 = vmax.f32 %v2029, 0.0
    %v2062 = vmax.f32 %v2030, 0.0
    %v2063 = vmax.f32 %v2031, 0.0
    %v2064 = vmax.f32 %v2032, 0.0
    %v2065 = vmax.f32 %v2033, 0.0
    %v2066 = vmax.f32 %v2034, 0.0
    %v2067 = vmax.f32 %v2035, 0.0
    %v2068 = vmax.f32 %v2036, 0.0
    %v2069 = vmax.f32 %v2037, 0.0
    %v2070 = vmax.f32 %v2038, 0.0
    %v2071 = vmax.f32 %v2039, 0.0
    %v2072 = vmax.f32 %v2040, 0.0
    %v2073 = vmax.f32 %v2041, 0.0
    %v2074 = vmax.f32 %v2042, 0.0
    %v2075 = vmax.f32 %v2043, 0.0
    %v2076 = vmax.f32 %v2044, 0.0
    %v2077 = vmax.f32 %v2045, 0.0
    %v2078 = vmax.f32 %v2046, 0.0
    %v2079 = vmax.f32 %v2047, 0.0
    %v2080 = vmax.f32 %v2048, 0.0
    %v2081 = vmax.f32 %v2049, 0.0
    %v2082 = vmax.f32 %v2050, 0.0
    %v2083 = vmax.f32 %v2051, 0.0
    %v2084 = vmax.f32 %v2052, 0.0
    %v2085 = vmax.f32 %v2053, 0.0
    %v2086 = vmax.f32 %v2054, 0.0
    %v2087 = vmax.f32 %v2055, 0.0
    %v2088 = vmax.f32 %v2056, 0.0
    %v2089 = vmax.f32 %v2057, 0.0
    %2090 = vst [vmem:[#allocation2] sm:$0xff] %v2058
    %2091 = vst [vmem:[#allocation2 + $0x8] sm:$0xff] %v2066
    %2092 = vst [vmem:[#allocation2 + $0x10] sm:$0xff] %v2074
    %2093 = vst [vmem:[#allocation2 + $0x18] sm:$0xff] %v2082
    %s2094 = scalar_lea.vmem [#allocation2], 32
    %2095 = vst [vmem:[%s2094] sm:$0xff] %v2059
    %2096 = vst [vmem:[%s2094 + $0x8] sm:$0xff] %v2067
    %2097 = vst [vmem:[%s2094 + $0x10] sm:$0xff] %v2075
    %2098 = vst [vmem:[%s2094 + $0x18] sm:$0xff] %v2083
    %s2099 = scalar_lea.vmem [#allocation2], 64
    %2100 = vst [vmem:[%s2099] sm:$0xff] %v2060
    %2101 = vst [vmem:[%s2099 + $0x8] sm:$0xff] %v2068
    %2102 = vst [vmem:[%s2099 + $0x10] sm:$0xff] %v2076
    %2103 = vst [vmem:[%s2099 + $0x18] sm:$0xff] %v2084
    %s2104 = scalar_lea.vmem [#allocation2], 96
    %2105 = vst [vmem:[%s2104] sm:$0xff] %v2061
    %2106 = vst [vmem:[%s2104 + $0x8] sm:$0xff] %v2069
    %2107 = vst [vmem:[%s2104 + $0x10] sm:$0xff] %v2077
    %2108 = vst [vmem:[%s2104 + $0x18] sm:$0xff] %v2085
    %s2109 = scalar_lea.vmem [#allocation2], 128
    %2110 = vst [vmem:[%s2109] sm:$0xff] %v2062
    %2111 = vst [vmem:[%s2109 + $0x8] sm:$0xff] %v2070
    %2112 = vst [vmem:[%s2109 + $0x10] sm:$0xff] %v2078
    %2113 = vst [vmem:[%s2109 + $0x18] sm:$0xff] %v2086
    %s2114 = scalar_lea.vmem [#allocation2], 160
    %2115 = vst [vmem:[%s2114] sm:$0xff] %v2063
    %2116 = vst [vmem:[%s2114 + $0x8] sm:$0xff] %v2071
    %2117 = vst [vmem:[%s2114 + $0x10] sm:$0xff] %v2079
    %2118 = vst [vmem:[%s2114 + $0x18] sm:$0xff] %v2087
    %s2119 = scalar_lea.vmem [#allocation2], 192
    %2120 = vst [vmem:[%s2119] sm:$0xff] %v2064
    %2121 = vst [vmem:[%s2119 + $0x8] sm:$0xff] %v2072
    %2122 = vst [vmem:[%s2119 + $0x10] sm:$0xff] %v2080
    %2123 = vst [vmem:[%s2119 + $0x18] sm:$0xff] %v2088
    %s2124 = scalar_lea.vmem [#allocation2], 224
    %2125 = vst [vmem:[%s2124] sm:$0xff] %v2065
    %2126 = vst [vmem:[%s2124 + $0x8] sm:$0xff] %v2073
    %2127 = vst [vmem:[%s2124 + $0x10] sm:$0xff] %v2081
    %2128 = vst [vmem:[%s2124 + $0x18] sm:$0xff] %v2089
    // Predicated region
    $region34: #{resnet_block.1} parent=1 // pred_check
      _
    $region35: #{resnet_block.1} parent=1 // pred_check_branch
      %2130 = sbr.rel (0) target = $region37
    $region36: #{resnet_block.1} parent=1 // pred_region
      %s2132 = ssub.s32 4096, 4096
      %2133 = vsyncadd [#allocation3], %s2132
      %s2134 = sshll.u32 [#allocation2], 4
      %s2135 = int_to_ptr.vmem [resolvable:$true] %s2134
      %2140 = dma.vmem_to_hbm [thread:$0]  %s2135, 4096, %s8, [#allocation3], 128, 128, 8
    $region37: #{resnet_block.1} parent=1 // pred_fallthru
      _
    // Predicated region
    $region38: #{resnet_block.1} parent=1 // pred_check
      _
    $region39: #{resnet_block.1} parent=1 // pred_check_branch
      %2142 = sbr.rel (0) target = $region41
    $region40: #{resnet_block.1} parent=1 // pred_region
      %2143 = dma.done [#allocation3], 4096
    $region41: #{resnet_block.1} parent=1 // pred_fallthru
      _
    %2144 = vsyncpa [#allocation3], 1

</llo_original>
